<compile_context>
chip_gen: v6e
topology: v6e:2x2x1
jax: 0.10.0
libtpu: 0.0.40
codegen_flags: <defaults>
</compile_context>

<pallas_src>
import jax
import jax.numpy as jnp
from jax import lax
from jax.experimental import pallas as pl
from jax.experimental.pallas import tpu as pltpu


def _make_lstm_kernel(seq_len, chunk_t, pack, Bp, H, mask_tail):
    """Builds the chunked LSTM kernel with static config baked in.

    Kernel refs (per time-chunk):
      x_ref:   (chunk_t*Bp, I)  time-major rows for this chunk, batch padded
      wih_ref: (I, 4H)          W_ih^T (f32)
      whh_ref: (H, 4H)          W_hh^T (bf16, MXU operand)
      b_ref:   (1, 4H)          b_ih + b_hh
      h0_ref/c0_ref: (Bp, H)    initial state
      y_ref:   (chunk_g, Bp, pack*H)  lane-dense packed hidden outputs
      hN_ref/cN_ref: (Bp, H)    final state (written on last chunk only)
      gx_sc:   (chunk_t*Bp, 4H) VMEM scratch, hoisted x-projection
      h_sc/c_sc: (Bp, H)        VMEM scratch, state carried across chunks
    """

    def kernel(x_ref, wih_ref, whh_ref, b_ref, h0_ref, c0_ref,
               y_ref, hN_ref, cN_ref, gx_sc, h_sc, c_sc):
        cidx = pl.program_id(0)
        n_chunks = pl.num_programs(0)

        @pl.when(cidx == 0)
        def _():
            h_sc[...] = h0_ref[...]
            c_sc[...] = c0_ref[...]

        # Hoisted input projection for the whole chunk (off the serial path):
        # one (chunk_t*Bp, I) x (I, 4H) matmul, bias folded in.
        gx_sc[...] = (jnp.dot(x_ref[...], wih_ref[...],
                              preferred_element_type=jnp.float32)
                      + b_ref[...])

        whh = whh_ref[...]                      # (H, 4H) bf16, loop-invariant
        G = chunk_t // pack                     # groups per chunk (static)

        def group(g, carry):
            h, c = carry                        # (Bp, H) f32, live in vregs
            packed = []
            for j in range(pack):               # static unroll by `pack`
                t_loc = g * pack + j
                row = pl.multiple_of(t_loc * Bp, Bp)
                # Recurrent matmul in bf16 on the MXU, f32 accumulation.
                gates = gx_sc[pl.ds(row, Bp), :] + jnp.dot(
                    h.astype(whh.dtype), whh,
                    preferred_element_type=jnp.float32)
                # Full-vreg transcendentals (2 EUP ops instead of 4 narrow).
                sig = jax.nn.sigmoid(gates)
                th = jnp.tanh(gates)
                i_g = sig[:, 0 * H:1 * H]
                f_g = sig[:, 1 * H:2 * H]
                o_g = sig[:, 3 * H:4 * H]
                g_g = th[:, 2 * H:3 * H]

                c_new = f_g * c + i_g * g_g
                h_new = o_g * jnp.tanh(c_new)
                packed.append(h_new)

                if mask_tail:
                    # Padded trailing time steps must not update the state.
                    t_glob = cidx * chunk_t + t_loc
                    keep = t_glob < seq_len
                    h = jnp.where(keep, h_new, h)
                    c = jnp.where(keep, c_new, c)
                else:
                    h, c = h_new, c_new

            # Lane-dense store: `pack` timesteps packed into one (Bp, pack*H)
            # full-width tile (pad timesteps store garbage, sliced off later).
            y_ref[g] = jnp.concatenate(packed, axis=-1).astype(y_ref.dtype)
            return h, c

        h_fin, c_fin = lax.fori_loop(0, G, group,
                                     (h_sc[...], c_sc[...]),
                                     unroll=(G <= 8))

        # Carry state to the next chunk.
        h_sc[...] = h_fin
        c_sc[...] = c_fin

        # Final state written exactly once.
        @pl.when(cidx == n_chunks - 1)
        def _():
            hN_ref[...] = h_fin.astype(hN_ref.dtype)
            cN_ref[...] = c_fin.astype(cN_ref.dtype)

    return kernel


@jax.jit
def lstm_forward_pallas(x, state, w_ih, w_hh, b_ih, b_hh):
    """Equivalent of MyLSTM.forward(x, state) for a 1-layer unidirectional LSTM.

    x:     (T, B, I)  float32, time-major (batch_first=False)
    state: (h0, c0), each (1, B, H)
    Returns (y, (h_n, c_n)) with y (T, B, H), h_n/c_n (1, B, H).
    """
    T, B, I = x.shape
    H = w_hh.shape[1]
    h0, c0 = state

    # bf16 recurrent-matmul LHS -> pad batch to the 16-row bf16 sublane tile.
    Bp = max(16, ((B + 15) // 16) * 16)

    # Pack 128/H timesteps per output tile so the y store is lane-dense.
    pack = 128 // H if (H <= 128 and 128 % H == 0) else 1
    groups_total = -(-T // pack)
    chunk_g = min(groups_total, 64)            # groups per time chunk
    n_chunks = -(-groups_total // chunk_g)
    chunk_t = chunk_g * pack                   # timesteps per chunk
    Tp = n_chunks * chunk_t                    # padded sequence length
    mask_tail = (Tp != T)

    # Pad time and batch (all of this fuses under the enclosing jit).
    xp = jnp.zeros((Tp, Bp, I), jnp.float32).at[:T, :B, :].set(
        x.astype(jnp.float32))
    x_flat = xp.reshape(Tp * Bp, I)                               # (Tp*Bp, I)
    h0p = jnp.zeros((Bp, H), jnp.float32).at[:B].set(
        h0.reshape(B, H).astype(jnp.float32))
    c0p = jnp.zeros((Bp, H), jnp.float32).at[:B].set(
        c0.reshape(B, H).astype(jnp.float32))

    wih_t = jnp.asarray(w_ih.T, jnp.float32)                      # (I, 4H)
    whh_t = jnp.asarray(w_hh.T, jnp.bfloat16)                     # (H, 4H) bf16
    bias = (b_ih + b_hh).reshape(1, 4 * H).astype(jnp.float32)    # (1, 4H)

    kernel = _make_lstm_kernel(T, chunk_t, pack, Bp, H, mask_tail)

    y_p, hN_p, cN_p = pl.pallas_call(
        kernel,
        out_shape=(
            jax.ShapeDtypeStruct((n_chunks * chunk_g, Bp, pack * H),
                                 jnp.float32),
            jax.ShapeDtypeStruct((Bp, H), jnp.float32),
            jax.ShapeDtypeStruct((Bp, H), jnp.float32),
        ),
        grid=(n_chunks,),
        in_specs=[
            pl.BlockSpec((chunk_t * Bp, I), lambda c: (c, 0)),      # x chunk
            pl.BlockSpec((I, 4 * H), lambda c: (0, 0)),             # W_ih^T
            pl.BlockSpec((H, 4 * H), lambda c: (0, 0)),             # W_hh^T
            pl.BlockSpec((1, 4 * H), lambda c: (0, 0)),             # bias
            pl.BlockSpec((Bp, H), lambda c: (0, 0)),                # h0
            pl.BlockSpec((Bp, H), lambda c: (0, 0)),                # c0
        ],
        out_specs=(
            pl.BlockSpec((chunk_g, Bp, pack * H), lambda c: (c, 0, 0)),
            pl.BlockSpec((Bp, H), lambda c: (0, 0)),
            pl.BlockSpec((Bp, H), lambda c: (0, 0)),
        ),
        scratch_shapes=[
            pltpu.VMEM((chunk_t * Bp, 4 * H), jnp.float32),   # hoisted x-proj
            pltpu.VMEM((Bp, H), jnp.float32),                 # carried h
            pltpu.VMEM((Bp, H), jnp.float32),                 # carried c
        ],
        compiler_params=pltpu.CompilerParams(
            dimension_semantics=("arbitrary",),               # serial recurrence
            vmem_limit_bytes=32 * 1024 * 1024),
    )(x_flat, wih_t, whh_t, bias, h0p, c0p)

    # Un-pack the lane-dense output: (GG, Bp, pack*H) -> (Tp, Bp, H).
    y = (y_p.reshape(n_chunks * chunk_g, Bp, pack, H)
             .transpose(0, 2, 1, 3)
             .reshape(Tp, Bp, H))[:T, :B, :].astype(x.dtype)
    h_n = hN_p[:B].reshape(1, B, H).astype(x.dtype)
    c_n = cN_p[:B].reshape(1, B, H).astype(x.dtype)
    return y, (h_n, c_n)


def lstm_forward_ref(x, state, w_ih, w_hh, b_ih, b_hh):
    """Pure-JAX f32 reference (PyTorch nn.LSTM semantics) for correctness."""
    T, B, I = x.shape
    H = w_hh.shape[1]
    h0, c0 = state
    h = h0.reshape(B, H)
    c = c0.reshape(B, H)
    bias = b_ih + b_hh

    def step(carry, x_t):
        h, c = carry
        gates = x_t @ w_ih.T + h @ w_hh.T + bias
        i_g = jax.nn.sigmoid(gates[:, 0 * H:1 * H])
        f_g = jax.nn.sigmoid(gates[:, 1 * H:2 * H])
        g_g = jnp.tanh(gates[:, 2 * H:3 * H])
        o_g = jax.nn.sigmoid(gates[:, 3 * H:4 * H])
        c_new = f_g * c + i_g * g_g
        h_new = o_g * jnp.tanh(c_new)
        return (h_new, c_new), h_new

    (h_n, c_n), ys = lax.scan(step, (h, c), x)
    return ys, (h_n.reshape(1, B, H), c_n.reshape(1, B, H))


if __name__ == "__main__":
    # Shapes implied by the demo: x = torch.randn(5, 3, 2) -> seq=5, batch=3,
    # input_size=2.  hidden_size chosen as 32, num_layers=1, unidirectional.
    T, B, I, H = 5, 3, 2, 32

    key = jax.random.PRNGKey(0)
    kx, kh, kc, k1, k2, k3, k4 = jax.random.split(key, 7)

    x = jax.random.normal(kx, (T, B, I), dtype=jnp.float32)
    h0 = jax.random.normal(kh, (1, B, H), dtype=jnp.float32)
    c0 = jax.random.normal(kc, (1, B, H), dtype=jnp.float32)

    # Deterministic parameter init (mirrors nn.LSTM's U(-1/sqrt(H), 1/sqrt(H))).
    stdv = 1.0 / (H ** 0.5)
    w_ih = jax.random.uniform(k1, (4 * H, I), jnp.float32, -stdv, stdv)
    w_hh = jax.random.uniform(k2, (4 * H, H), jnp.float32, -stdv, stdv)
    b_ih = jax.random.uniform(k3, (4 * H,), jnp.float32, -stdv, stdv)
    b_hh = jax.random.uniform(k4, (4 * H,), jnp.float32, -stdv, stdv)

    y, (h_n, c_n) = lstm_forward_pallas(x, (h0, c0), w_ih, w_hh, b_ih, b_hh)
    jax.block_until_ready((y, h_n, c_n))

    y_ref, (h_ref, c_ref) = lstm_forward_ref(x, (h0, c0), w_ih, w_hh, b_ih, b_hh)
    assert y.shape == (T, B, H) and h_n.shape == (1, B, H) and c_n.shape == (1, B, H)
    # Tolerance relaxed for the bf16 recurrent-matmul operands (f32 accum).
    assert jnp.allclose(y, y_ref, atol=2e-2, rtol=2e-2)
    assert jnp.allclose(h_n, h_ref, atol=2e-2, rtol=2e-2)
    assert jnp.allclose(c_n, c_ref, atol=2e-2, rtol=2e-2)

    # TODO(synk): num_layers>1, bidirectional, dropout and packed variable-length
    # sequences of nn.LSTM are not exercised by the demo and are not implemented.
    # TODO(synk): for B>=16 on v7x, add a batch grid axis marked "parallel" to
    # use the second TensorCore; the demo batch (3) does not warrant it.
    print("KERNEL_OK")
</pallas_src>

<mosaic_0001>
module attributes {stable_mosaic.version = 11 : i64} {
  func.func @kernel(%arg0: i32, %arg1: memref<128x2xf32, #tpu.memory_space<vmem>>, %arg2: memref<2x128xf32, #tpu.memory_space<vmem>>, %arg3: memref<32x128xbf16, #tpu.memory_space<vmem>>, %arg4: memref<1x128xf32, #tpu.memory_space<vmem>>, %arg5: memref<16x32xf32, #tpu.memory_space<vmem>>, %arg6: memref<16x32xf32, #tpu.memory_space<vmem>>, %arg7: memref<2x16x128xf32, #tpu.memory_space<vmem>>, %arg8: memref<16x32xf32, #tpu.memory_space<vmem>>, %arg9: memref<16x32xf32, #tpu.memory_space<vmem>>, %arg10: memref<128x128xf32, #tpu.memory_space<vmem>>, %arg11: memref<16x32xf32, #tpu.memory_space<vmem>>, %arg12: memref<16x32xf32, #tpu.memory_space<vmem>>) attributes {dimension_semantics = [#tpu.dimension_semantics<arbitrary>], iteration_bounds = array<i64: 1>, scalar_prefetch = 0 : i64, scratch_operands = 3 : i64, tpu.core_type = #tpu.core_type<tc>, window_params = [{transform_indices = @transform_0, window_bounds = array<i64: 128, 2>}, {pipeline_mode = #tpu.pipeline_mode<synchronous>, transform_indices = @transform_1, window_bounds = array<i64: 2, 128>}, {pipeline_mode = #tpu.pipeline_mode<synchronous>, transform_indices = @transform_2, window_bounds = array<i64: 32, 128>}, {pipeline_mode = #tpu.pipeline_mode<synchronous>, transform_indices = @transform_3, window_bounds = array<i64: 1, 128>}, {pipeline_mode = #tpu.pipeline_mode<synchronous>, transform_indices = @transform_4, window_bounds = array<i64: 16, 32>}, {pipeline_mode = #tpu.pipeline_mode<synchronous>, transform_indices = @transform_5, window_bounds = array<i64: 16, 32>}, {transform_indices = @transform_6, window_bounds = array<i64: 2, 16, 128>}, {pipeline_mode = #tpu.pipeline_mode<synchronous>, transform_indices = @transform_7, window_bounds = array<i64: 16, 32>}, {pipeline_mode = #tpu.pipeline_mode<synchronous>, transform_indices = @transform_8, window_bounds = array<i64: 16, 32>}]} {
    %c0_i32 = arith.constant 0 : i32
    %0 = arith.cmpi eq, %arg0, %c0_i32 : i32
    %1 = arith.extui %0 : i1 to i32
    %c0_i32_0 = arith.constant 0 : i32
    %2 = arith.cmpi ne, %1, %c0_i32_0 : i32
    scf.if %2 {
      %c0_84 = arith.constant 0 : index
      %c0_85 = arith.constant 0 : index
      %260 = vector.load %arg5[%c0_84, %c0_85] : memref<16x32xf32, #tpu.memory_space<vmem>>, vector<16x32xf32>
      %c0_86 = arith.constant 0 : index
      %c0_87 = arith.constant 0 : index
      %261 = vector.load %arg11[%c0_86, %c0_87] : memref<16x32xf32, #tpu.memory_space<vmem>>, vector<16x32xf32>
      tpu.vector_store %arg11[%c0_86, %c0_87], %260 {strides = array<i32>} : memref<16x32xf32, #tpu.memory_space<vmem>>, vector<16x32xf32>,
      %c0_88 = arith.constant 0 : index
      %c0_89 = arith.constant 0 : index
      %262 = vector.load %arg6[%c0_88, %c0_89] : memref<16x32xf32, #tpu.memory_space<vmem>>, vector<16x32xf32>
      %c0_90 = arith.constant 0 : index
      %c0_91 = arith.constant 0 : index
      %263 = vector.load %arg12[%c0_90, %c0_91] : memref<16x32xf32, #tpu.memory_space<vmem>>, vector<16x32xf32>
      tpu.vector_store %arg12[%c0_90, %c0_91], %262 {strides = array<i32>} : memref<16x32xf32, #tpu.memory_space<vmem>>, vector<16x32xf32>,
    } else {
    }
    %c0 = arith.constant 0 : index
    %c0_1 = arith.constant 0 : index
    %3 = vector.load %arg1[%c0, %c0_1] : memref<128x2xf32, #tpu.memory_space<vmem>>, vector<128x2xf32>
    %c0_2 = arith.constant 0 : index
    %c0_3 = arith.constant 0 : index
    %4 = vector.load %arg2[%c0_2, %c0_3] : memref<2x128xf32, #tpu.memory_space<vmem>>, vector<2x128xf32>
    %cst = arith.constant dense<0.000000e+00> : vector<128x128xf32>
    %5 = tpu.matmul %3, %4, %cst {dimension_numbers = #tpu.dot_dimension_numbers<[1], [0], [0], [1], [0, 0, 1, 1], [], []>} : vector<128x2xf32>, vector<2x128xf32>, vector<128x128xf32> -> vector<128x128xf32>
    %c0_4 = arith.constant 0 : index
    %c0_5 = arith.constant 0 : index
    %6 = vector.load %arg4[%c0_4, %c0_5] : memref<1x128xf32, #tpu.memory_space<vmem>>, vector<1x128xf32>
    %7 = vector.broadcast %6 : vector<1x128xf32> to vector<128x128xf32>
    %8 = arith.addf %5, %7 : vector<128x128xf32>
    %c0_6 = arith.constant 0 : index
    %c0_7 = arith.constant 0 : index
    %9 = vector.load %arg10[%c0_6, %c0_7] : memref<128x128xf32, #tpu.memory_space<vmem>>, vector<128x128xf32>
    tpu.vector_store %arg10[%c0_6, %c0_7], %8 {strides = array<i32>} : memref<128x128xf32, #tpu.memory_space<vmem>>, vector<128x128xf32>,
    %c0_8 = arith.constant 0 : index
    %c0_9 = arith.constant 0 : index
    %10 = vector.load %arg3[%c0_8, %c0_9] : memref<32x128xbf16, #tpu.memory_space<vmem>>, vector<32x128xbf16>
    %c0_10 = arith.constant 0 : index
    %c0_11 = arith.constant 0 : index
    %11 = vector.load %arg11[%c0_10, %c0_11] : memref<16x32xf32, #tpu.memory_space<vmem>>, vector<16x32xf32>
    %c0_12 = arith.constant 0 : index
    %c0_13 = arith.constant 0 : index
    %12 = vector.load %arg12[%c0_12, %c0_13] : memref<16x32xf32, #tpu.memory_space<vmem>>, vector<16x32xf32>
    %c0_i32_14 = arith.constant 0 : i32
    %c4_i32 = arith.constant 4 : i32
    %13 = arith.muli %c0_i32_14, %c4_i32 : i32
    %c0_i32_15 = arith.constant 0 : i32
    %14 = arith.addi %13, %c0_i32_15 : i32
    %c16_i32 = arith.constant 16 : i32
    %15 = arith.muli %14, %c16_i32 : i32
    %16 = tpu.assume_multiple %15, 16 : i32
    %17 = arith.index_cast %16 : i32 to index
    %c0_16 = arith.constant 0 : index
    %18 = vector.load %arg10[%17, %c0_16] : memref<128x128xf32, #tpu.memory_space<vmem>>, vector<16x128xf32>
    %19 = arith.truncf %11 : vector<16x32xf32> to vector<16x32xbf16>
    %cst_17 = arith.constant dense<0.000000e+00> : vector<16x128xf32>
    %20 = tpu.matmul %19, %10, %cst_17 {dimension_numbers = #tpu.dot_dimension_numbers<[1], [0], [0], [1], [0, 0, 1, 1], [], []>} : vector<16x32xbf16>, vector<32x128xbf16>, vector<16x128xf32> -> vector<16x128xf32>
    %21 = arith.addf %18, %20 : vector<16x128xf32>
    %22 = arith.negf %21 : vector<16x128xf32>
    %23 = math.exp %22 : vector<16x128xf32>
    %cst_18 = arith.constant 1.000000e+00 : f32
    %24 = vector.broadcast %cst_18 : f32 to vector<16x128xf32>
    %25 = arith.addf %24, %23 : vector<16x128xf32>
    %26 = arith.divf %24, %25 : vector<16x128xf32>
    %27 = math.tanh %21 : vector<16x128xf32>
    %28 = vector.extract_strided_slice %26 {offsets = [0, 0], sizes = [16, 32], strides = [1, 1]} : vector<16x128xf32> to vector<16x32xf32>
    %29 = vector.extract_strided_slice %26 {offsets = [0, 32], sizes = [16, 32], strides = [1, 1]} : vector<16x128xf32> to vector<16x32xf32>
    %30 = vector.extract_strided_slice %26 {offsets = [0, 96], sizes = [16, 32], strides = [1, 1]} : vector<16x128xf32> to vector<16x32xf32>
    %31 = vector.extract_strided_slice %27 {offsets = [0, 64], sizes = [16, 32], strides = [1, 1]} : vector<16x128xf32> to vector<16x32xf32>
    %32 = arith.mulf %29, %12 : vector<16x32xf32>
    %33 = arith.mulf %28, %31 : vector<16x32xf32>
    %34 = arith.addf %32, %33 : vector<16x32xf32>
    %35 = math.tanh %34 : vector<16x32xf32>
    %36 = arith.mulf %30, %35 : vector<16x32xf32>
    %c8_i32 = arith.constant 8 : i32
    %37 = arith.muli %arg0, %c8_i32 : i32
    %38 = arith.addi %37, %14 : i32
    %c5_i32 = arith.constant 5 : i32
    %39 = arith.cmpi slt, %38, %c5_i32 : i32
    %40 = arith.select %39, %36, %11 : vector<16x32xf32>
    %41 = arith.select %39, %34, %12 : vector<16x32xf32>
    %c4_i32_19 = arith.constant 4 : i32
    %42 = arith.muli %c0_i32_14, %c4_i32_19 : i32
    %c1_i32 = arith.constant 1 : i32
    %43 = arith.addi %42, %c1_i32 : i32
    %c16_i32_20 = arith.constant 16 : i32
    %44 = arith.muli %43, %c16_i32_20 : i32
    %45 = tpu.assume_multiple %44, 16 : i32
    %46 = arith.index_cast %45 : i32 to index
    %c0_21 = arith.constant 0 : index
    %47 = vector.load %arg10[%46, %c0_21] : memref<128x128xf32, #tpu.memory_space<vmem>>, vector<16x128xf32>
    %48 = arith.truncf %40 : vector<16x32xf32> to vector<16x32xbf16>
    %cst_22 = arith.constant dense<0.000000e+00> : vector<16x128xf32>
    %49 = tpu.matmul %48, %10, %cst_22 {dimension_numbers = #tpu.dot_dimension_numbers<[1], [0], [0], [1], [0, 0, 1, 1], [], []>} : vector<16x32xbf16>, vector<32x128xbf16>, vector<16x128xf32> -> vector<16x128xf32>
    %50 = arith.addf %47, %49 : vector<16x128xf32>
    %51 = arith.negf %50 : vector<16x128xf32>
    %52 = math.exp %51 : vector<16x128xf32>
    %cst_23 = arith.constant 1.000000e+00 : f32
    %53 = vector.broadcast %cst_23 : f32 to vector<16x128xf32>
    %54 = arith.addf %53, %52 : vector<16x128xf32>
    %55 = arith.divf %53, %54 : vector<16x128xf32>
    %56 = math.tanh %50 : vector<16x128xf32>
    %57 = vector.extract_strided_slice %55 {offsets = [0, 0], sizes = [16, 32], strides = [1, 1]} : vector<16x128xf32> to vector<16x32xf32>
    %58 = vector.extract_strided_slice %55 {offsets = [0, 32], sizes = [16, 32], strides = [1, 1]} : vector<16x128xf32> to vector<16x32xf32>
    %59 = vector.extract_strided_slice %55 {offsets = [0, 96], sizes = [16, 32], strides = [1, 1]} : vector<16x128xf32> to vector<16x32xf32>
    %60 = vector.extract_strided_slice %56 {offsets = [0, 64], sizes = [16, 32], strides = [1, 1]} : vector<16x128xf32> to vector<16x32xf32>
    %61 = arith.mulf %58, %41 : vector<16x32xf32>
    %62 = arith.mulf %57, %60 : vector<16x32xf32>
    %63 = arith.addf %61, %62 : vector<16x32xf32>
    %64 = math.tanh %63 : vector<16x32xf32>
    %65 = arith.mulf %59, %64 : vector<16x32xf32>
    %c8_i32_24 = arith.constant 8 : i32
    %66 = arith.muli %arg0, %c8_i32_24 : i32
    %67 = arith.addi %66, %43 : i32
    %c5_i32_25 = arith.constant 5 : i32
    %68 = arith.cmpi slt, %67, %c5_i32_25 : i32
    %69 = arith.select %68, %65, %40 : vector<16x32xf32>
    %70 = arith.select %68, %63, %41 : vector<16x32xf32>
    %c4_i32_26 = arith.constant 4 : i32
    %71 = arith.muli %c0_i32_14, %c4_i32_26 : i32
    %c2_i32 = arith.constant 2 : i32
    %72 = arith.addi %71, %c2_i32 : i32
    %c16_i32_27 = arith.constant 16 : i32
    %73 = arith.muli %72, %c16_i32_27 : i32
    %74 = tpu.assume_multiple %73, 16 : i32
    %75 = arith.index_cast %74 : i32 to index
    %c0_28 = arith.constant 0 : index
    %76 = vector.load %arg10[%75, %c0_28] : memref<128x128xf32, #tpu.memory_space<vmem>>, vector<16x128xf32>
    %77 = arith.truncf %69 : vector<16x32xf32> to vector<16x32xbf16>
    %cst_29 = arith.constant dense<0.000000e+00> : vector<16x128xf32>
    %78 = tpu.matmul %77, %10, %cst_29 {dimension_numbers = #tpu.dot_dimension_numbers<[1], [0], [0], [1], [0, 0, 1, 1], [], []>} : vector<16x32xbf16>, vector<32x128xbf16>, vector<16x128xf32> -> vector<16x128xf32>
    %79 = arith.addf %76, %78 : vector<16x128xf32>
    %80 = arith.negf %79 : vector<16x128xf32>
    %81 = math.exp %80 : vector<16x128xf32>
    %cst_30 = arith.constant 1.000000e+00 : f32
    %82 = vector.broadcast %cst_30 : f32 to vector<16x128xf32>
    %83 = arith.addf %82, %81 : vector<16x128xf32>
    %84 = arith.divf %82, %83 : vector<16x128xf32>
    %85 = math.tanh %79 : vector<16x128xf32>
    %86 = vector.extract_strided_slice %84 {offsets = [0, 0], sizes = [16, 32], strides = [1, 1]} : vector<16x128xf32> to vector<16x32xf32>
    %87 = vector.extract_strided_slice %84 {offsets = [0, 32], sizes = [16, 32], strides = [1, 1]} : vector<16x128xf32> to vector<16x32xf32>
    %88 = vector.extract_strided_slice %84 {offsets = [0, 96], sizes = [16, 32], strides = [1, 1]} : vector<16x128xf32> to vector<16x32xf32>
    %89 = vector.extract_strided_slice %85 {offsets = [0, 64], sizes = [16, 32], strides = [1, 1]} : vector<16x128xf32> to vector<16x32xf32>
    %90 = arith.mulf %87, %70 : vector<16x32xf32>
    %91 = arith.mulf %86, %89 : vector<16x32xf32>
    %92 = arith.addf %90, %91 : vector<16x32xf32>
    %93 = math.tanh %92 : vector<16x32xf32>
    %94 = arith.mulf %88, %93 : vector<16x32xf32>
    %c8_i32_31 = arith.constant 8 : i32
    %95 = arith.muli %arg0, %c8_i32_31 : i32
    %96 = arith.addi %95, %72 : i32
    %c5_i32_32 = arith.constant 5 : i32
    %97 = arith.cmpi slt, %96, %c5_i32_32 : i32
    %98 = arith.select %97, %94, %69 : vector<16x32xf32>
    %99 = arith.select %97, %92, %70 : vector<16x32xf32>
    %c4_i32_33 = arith.constant 4 : i32
    %100 = arith.muli %c0_i32_14, %c4_i32_33 : i32
    %c3_i32 = arith.constant 3 : i32
    %101 = arith.addi %100, %c3_i32 : i32
    %c16_i32_34 = arith.constant 16 : i32
    %102 = arith.muli %101, %c16_i32_34 : i32
    %103 = tpu.assume_multiple %102, 16 : i32
    %104 = arith.index_cast %103 : i32 to index
    %c0_35 = arith.constant 0 : index
    %105 = vector.load %arg10[%104, %c0_35] : memref<128x128xf32, #tpu.memory_space<vmem>>, vector<16x128xf32>
    %106 = arith.truncf %98 : vector<16x32xf32> to vector<16x32xbf16>
    %cst_36 = arith.constant dense<0.000000e+00> : vector<16x128xf32>
    %107 = tpu.matmul %106, %10, %cst_36 {dimension_numbers = #tpu.dot_dimension_numbers<[1], [0], [0], [1], [0, 0, 1, 1], [], []>} : vector<16x32xbf16>, vector<32x128xbf16>, vector<16x128xf32> -> vector<16x128xf32>
    %108 = arith.addf %105, %107 : vector<16x128xf32>
    %109 = arith.negf %108 : vector<16x128xf32>
    %110 = math.exp %109 : vector<16x128xf32>
    %cst_37 = arith.constant 1.000000e+00 : f32
    %111 = vector.broadcast %cst_37 : f32 to vector<16x128xf32>
    %112 = arith.addf %111, %110 : vector<16x128xf32>
    %113 = arith.divf %111, %112 : vector<16x128xf32>
    %114 = math.tanh %108 : vector<16x128xf32>
    %115 = vector.extract_strided_slice %113 {offsets = [0, 0], sizes = [16, 32], strides = [1, 1]} : vector<16x128xf32> to vector<16x32xf32>
    %116 = vector.extract_strided_slice %113 {offsets = [0, 32], sizes = [16, 32], strides = [1, 1]} : vector<16x128xf32> to vector<16x32xf32>
    %117 = vector.extract_strided_slice %113 {offsets = [0, 96], sizes = [16, 32], strides = [1, 1]} : vector<16x128xf32> to vector<16x32xf32>
    %118 = vector.extract_strided_slice %114 {offsets = [0, 64], sizes = [16, 32], strides = [1, 1]} : vector<16x128xf32> to vector<16x32xf32>
    %119 = arith.mulf %116, %99 : vector<16x32xf32>
    %120 = arith.mulf %115, %118 : vector<16x32xf32>
    %121 = arith.addf %119, %120 : vector<16x32xf32>
    %122 = math.tanh %121 : vector<16x32xf32>
    %123 = arith.mulf %117, %122 : vector<16x32xf32>
    %c8_i32_38 = arith.constant 8 : i32
    %124 = arith.muli %arg0, %c8_i32_38 : i32
    %125 = arith.addi %124, %101 : i32
    %c5_i32_39 = arith.constant 5 : i32
    %126 = arith.cmpi slt, %125, %c5_i32_39 : i32
    %127 = arith.select %126, %123, %98 : vector<16x32xf32>
    %128 = arith.select %126, %121, %99 : vector<16x32xf32>
    %129 = tpu.concatenate %36, %65, %94, %123 in 1 : vector<16x32xf32>, vector<16x32xf32>, vector<16x32xf32>, vector<16x32xf32> -> vector<16x128xf32>
    %130 = arith.index_cast %c0_i32_14 : i32 to index
    %c0_40 = arith.constant 0 : index
    %c0_41 = arith.constant 0 : index
    %131 = vector.load %arg7[%130, %c0_40, %c0_41] : memref<2x16x128xf32, #tpu.memory_space<vmem>>, vector<1x16x128xf32>
    %132 = vector.shape_cast %131 : vector<1x16x128xf32> to vector<16x128xf32>
    %133 = vector.shape_cast %129 : vector<16x128xf32> to vector<1x16x128xf32>
    tpu.vector_store %arg7[%130, %c0_40, %c0_41], %133 {strides = array<i32>} : memref<2x16x128xf32, #tpu.memory_space<vmem>>, vector<1x16x128xf32>,
    %c1_i32_42 = arith.constant 1 : i32
    %c4_i32_43 = arith.constant 4 : i32
    %134 = arith.muli %c1_i32_42, %c4_i32_43 : i32
    %c0_i32_44 = arith.constant 0 : i32
    %135 = arith.addi %134, %c0_i32_44 : i32
    %c16_i32_45 = arith.constant 16 : i32
    %136 = arith.muli %135, %c16_i32_45 : i32
    %137 = tpu.assume_multiple %136, 16 : i32
    %138 = arith.index_cast %137 : i32 to index
    %c0_46 = arith.constant 0 : index
    %139 = vector.load %arg10[%138, %c0_46] : memref<128x128xf32, #tpu.memory_space<vmem>>, vector<16x128xf32>
    %140 = arith.truncf %127 : vector<16x32xf32> to vector<16x32xbf16>
    %cst_47 = arith.constant dense<0.000000e+00> : vector<16x128xf32>
    %141 = tpu.matmul %140, %10, %cst_47 {dimension_numbers = #tpu.dot_dimension_numbers<[1], [0], [0], [1], [0, 0, 1, 1], [], []>} : vector<16x32xbf16>, vector<32x128xbf16>, vector<16x128xf32> -> vector<16x128xf32>
    %142 = arith.addf %139, %141 : vector<16x128xf32>
    %143 = arith.negf %142 : vector<16x128xf32>
    %144 = math.exp %143 : vector<16x128xf32>
    %cst_48 = arith.constant 1.000000e+00 : f32
    %145 = vector.broadcast %cst_48 : f32 to vector<16x128xf32>
    %146 = arith.addf %145, %144 : vector<16x128xf32>
    %147 = arith.divf %145, %146 : vector<16x128xf32>
    %148 = math.tanh %142 : vector<16x128xf32>
    %149 = vector.extract_strided_slice %147 {offsets = [0, 0], sizes = [16, 32], strides = [1, 1]} : vector<16x128xf32> to vector<16x32xf32>
    %150 = vector.extract_strided_slice %147 {offsets = [0, 32], sizes = [16, 32], strides = [1, 1]} : vector<16x128xf32> to vector<16x32xf32>
    %151 = vector.extract_strided_slice %147 {offsets = [0, 96], sizes = [16, 32], strides = [1, 1]} : vector<16x128xf32> to vector<16x32xf32>
    %152 = vector.extract_strided_slice %148 {offsets = [0, 64], sizes = [16, 32], strides = [1, 1]} : vector<16x128xf32> to vector<16x32xf32>
    %153 = arith.mulf %150, %128 : vector<16x32xf32>
    %154 = arith.mulf %149, %152 : vector<16x32xf32>
    %155 = arith.addf %153, %154 : vector<16x32xf32>
    %156 = math.tanh %155 : vector<16x32xf32>
    %157 = arith.mulf %151, %156 : vector<16x32xf32>
    %c8_i32_49 = arith.constant 8 : i32
    %158 = arith.muli %arg0, %c8_i32_49 : i32
    %159 = arith.addi %158, %135 : i32
    %c5_i32_50 = arith.constant 5 : i32
    %160 = arith.cmpi slt, %159, %c5_i32_50 : i32
    %161 = arith.select %160, %157, %127 : vector<16x32xf32>
    %162 = arith.select %160, %155, %128 : vector<16x32xf32>
    %c4_i32_51 = arith.constant 4 : i32
    %163 = arith.muli %c1_i32_42, %c4_i32_51 : i32
    %c1_i32_52 = arith.constant 1 : i32
    %164 = arith.addi %163, %c1_i32_52 : i32
    %c16_i32_53 = arith.constant 16 : i32
    %165 = arith.muli %164, %c16_i32_53 : i32
    %166 = tpu.assume_multiple %165, 16 : i32
    %167 = arith.index_cast %166 : i32 to index
    %c0_54 = arith.constant 0 : index
    %168 = vector.load %arg10[%167, %c0_54] : memref<128x128xf32, #tpu.memory_space<vmem>>, vector<16x128xf32>
    %169 = arith.truncf %161 : vector<16x32xf32> to vector<16x32xbf16>
    %cst_55 = arith.constant dense<0.000000e+00> : vector<16x128xf32>
    %170 = tpu.matmul %169, %10, %cst_55 {dimension_numbers = #tpu.dot_dimension_numbers<[1], [0], [0], [1], [0, 0, 1, 1], [], []>} : vector<16x32xbf16>, vector<32x128xbf16>, vector<16x128xf32> -> vector<16x128xf32>
    %171 = arith.addf %168, %170 : vector<16x128xf32>
    %172 = arith.negf %171 : vector<16x128xf32>
    %173 = math.exp %172 : vector<16x128xf32>
    %cst_56 = arith.constant 1.000000e+00 : f32
    %174 = vector.broadcast %cst_56 : f32 to vector<16x128xf32>
    %175 = arith.addf %174, %173 : vector<16x128xf32>
    %176 = arith.divf %174, %175 : vector<16x128xf32>
    %177 = math.tanh %171 : vector<16x128xf32>
    %178 = vector.extract_strided_slice %176 {offsets = [0, 0], sizes = [16, 32], strides = [1, 1]} : vector<16x128xf32> to vector<16x32xf32>
    %179 = vector.extract_strided_slice %176 {offsets = [0, 32], sizes = [16, 32], strides = [1, 1]} : vector<16x128xf32> to vector<16x32xf32>
    %180 = vector.extract_strided_slice %176 {offsets = [0, 96], sizes = [16, 32], strides = [1, 1]} : vector<16x128xf32> to vector<16x32xf32>
    %181 = vector.extract_strided_slice %177 {offsets = [0, 64], sizes = [16, 32], strides = [1, 1]} : vector<16x128xf32> to vector<16x32xf32>
    %182 = arith.mulf %179, %162 : vector<16x32xf32>
    %183 = arith.mulf %178, %181 : vector<16x32xf32>
    %184 = arith.addf %182, %183 : vector<16x32xf32>
    %185 = math.tanh %184 : vector<16x32xf32>
    %186 = arith.mulf %180, %185 : vector<16x32xf32>
    %c8_i32_57 = arith.constant 8 : i32
    %187 = arith.muli %arg0, %c8_i32_57 : i32
    %188 = arith.addi %187, %164 : i32
    %c5_i32_58 = arith.constant 5 : i32
    %189 = arith.cmpi slt, %188, %c5_i32_58 : i32
    %190 = arith.select %189, %186, %161 : vector<16x32xf32>
    %191 = arith.select %189, %184, %162 : vector<16x32xf32>
    %c4_i32_59 = arith.constant 4 : i32
    %192 = arith.muli %c1_i32_42, %c4_i32_59 : i32
    %c2_i32_60 = arith.constant 2 : i32
    %193 = arith.addi %192, %c2_i32_60 : i32
    %c16_i32_61 = arith.constant 16 : i32
    %194 = arith.muli %193, %c16_i32_61 : i32
    %195 = tpu.assume_multiple %194, 16 : i32
    %196 = arith.index_cast %195 : i32 to index
    %c0_62 = arith.constant 0 : index
    %197 = vector.load %arg10[%196, %c0_62] : memref<128x128xf32, #tpu.memory_space<vmem>>, vector<16x128xf32>
    %198 = arith.truncf %190 : vector<16x32xf32> to vector<16x32xbf16>
    %cst_63 = arith.constant dense<0.000000e+00> : vector<16x128xf32>
    %199 = tpu.matmul %198, %10, %cst_63 {dimension_numbers = #tpu.dot_dimension_numbers<[1], [0], [0], [1], [0, 0, 1, 1], [], []>} : vector<16x32xbf16>, vector<32x128xbf16>, vector<16x128xf32> -> vector<16x128xf32>
    %200 = arith.addf %197, %199 : vector<16x128xf32>
    %201 = arith.negf %200 : vector<16x128xf32>
    %202 = math.exp %201 : vector<16x128xf32>
    %cst_64 = arith.constant 1.000000e+00 : f32
    %203 = vector.broadcast %cst_64 : f32 to vector<16x128xf32>
    %204 = arith.addf %203, %202 : vector<16x128xf32>
    %205 = arith.divf %203, %204 : vector<16x128xf32>
    %206 = math.tanh %200 : vector<16x128xf32>
    %207 = vector.extract_strided_slice %205 {offsets = [0, 0], sizes = [16, 32], strides = [1, 1]} : vector<16x128xf32> to vector<16x32xf32>
    %208 = vector.extract_strided_slice %205 {offsets = [0, 32], sizes = [16, 32], strides = [1, 1]} : vector<16x128xf32> to vector<16x32xf32>
    %209 = vector.extract_strided_slice %205 {offsets = [0, 96], sizes = [16, 32], strides = [1, 1]} : vector<16x128xf32> to vector<16x32xf32>
    %210 = vector.extract_strided_slice %206 {offsets = [0, 64], sizes = [16, 32], strides = [1, 1]} : vector<16x128xf32> to vector<16x32xf32>
    %211 = arith.mulf %208, %191 : vector<16x32xf32>
    %212 = arith.mulf %207, %210 : vector<16x32xf32>
    %213 = arith.addf %211, %212 : vector<16x32xf32>
    %214 = math.tanh %213 : vector<16x32xf32>
    %215 = arith.mulf %209, %214 : vector<16x32xf32>
    %c8_i32_65 = arith.constant 8 : i32
    %216 = arith.muli %arg0, %c8_i32_65 : i32
    %217 = arith.addi %216, %193 : i32
    %c5_i32_66 = arith.constant 5 : i32
    %218 = arith.cmpi slt, %217, %c5_i32_66 : i32
    %219 = arith.select %218, %215, %190 : vector<16x32xf32>
    %220 = arith.select %218, %213, %191 : vector<16x32xf32>
    %c4_i32_67 = arith.constant 4 : i32
    %221 = arith.muli %c1_i32_42, %c4_i32_67 : i32
    %c3_i32_68 = arith.constant 3 : i32
    %222 = arith.addi %221, %c3_i32_68 : i32
    %c16_i32_69 = arith.constant 16 : i32
    %223 = arith.muli %222, %c16_i32_69 : i32
    %224 = tpu.assume_multiple %223, 16 : i32
    %225 = arith.index_cast %224 : i32 to index
    %c0_70 = arith.constant 0 : index
    %226 = vector.load %arg10[%225, %c0_70] : memref<128x128xf32, #tpu.memory_space<vmem>>, vector<16x128xf32>
    %227 = arith.truncf %219 : vector<16x32xf32> to vector<16x32xbf16>
    %cst_71 = arith.constant dense<0.000000e+00> : vector<16x128xf32>
    %228 = tpu.matmul %227, %10, %cst_71 {dimension_numbers = #tpu.dot_dimension_numbers<[1], [0], [0], [1], [0, 0, 1, 1], [], []>} : vector<16x32xbf16>, vector<32x128xbf16>, vector<16x128xf32> -> vector<16x128xf32>
    %229 = arith.addf %226, %228 : vector<16x128xf32>
    %230 = arith.negf %229 : vector<16x128xf32>
    %231 = math.exp %230 : vector<16x128xf32>
    %cst_72 = arith.constant 1.000000e+00 : f32
    %232 = vector.broadcast %cst_72 : f32 to vector<16x128xf32>
    %233 = arith.addf %232, %231 : vector<16x128xf32>
    %234 = arith.divf %232, %233 : vector<16x128xf32>
    %235 = math.tanh %229 : vector<16x128xf32>
    %236 = vector.extract_strided_slice %234 {offsets = [0, 0], sizes = [16, 32], strides = [1, 1]} : vector<16x128xf32> to vector<16x32xf32>
    %237 = vector.extract_strided_slice %234 {offsets = [0, 32], sizes = [16, 32], strides = [1, 1]} : vector<16x128xf32> to vector<16x32xf32>
    %238 = vector.extract_strided_slice %234 {offsets = [0, 96], sizes = [16, 32], strides = [1, 1]} : vector<16x128xf32> to vector<16x32xf32>
    %239 = vector.extract_strided_slice %235 {offsets = [0, 64], sizes = [16, 32], strides = [1, 1]} : vector<16x128xf32> to vector<16x32xf32>
    %240 = arith.mulf %237, %220 : vector<16x32xf32>
    %241 = arith.mulf %236, %239 : vector<16x32xf32>
    %242 = arith.addf %240, %241 : vector<16x32xf32>
    %243 = math.tanh %242 : vector<16x32xf32>
    %244 = arith.mulf %238, %243 : vector<16x32xf32>
    %c8_i32_73 = arith.constant 8 : i32
    %245 = arith.muli %arg0, %c8_i32_73 : i32
    %246 = arith.addi %245, %222 : i32
    %c5_i32_74 = arith.constant 5 : i32
    %247 = arith.cmpi slt, %246, %c5_i32_74 : i32
    %248 = arith.select %247, %244, %219 : vector<16x32xf32>
    %249 = arith.select %247, %242, %220 : vector<16x32xf32>
    %250 = tpu.concatenate %157, %186, %215, %244 in 1 : vector<16x32xf32>, vector<16x32xf32>, vector<16x32xf32>, vector<16x32xf32> -> vector<16x128xf32>
    %251 = arith.index_cast %c1_i32_42 : i32 to index
    %c0_75 = arith.constant 0 : index
    %c0_76 = arith.constant 0 : index
    %252 = vector.load %arg7[%251, %c0_75, %c0_76] : memref<2x16x128xf32, #tpu.memory_space<vmem>>, vector<1x16x128xf32>
    %253 = vector.shape_cast %252 : vector<1x16x128xf32> to vector<16x128xf32>
    %254 = vector.shape_cast %250 : vector<16x128xf32> to vector<1x16x128xf32>
    tpu.vector_store %arg7[%251, %c0_75, %c0_76], %254 {strides = array<i32>} : memref<2x16x128xf32, #tpu.memory_space<vmem>>, vector<1x16x128xf32>,
    %c2_i32_77 = arith.constant 2 : i32
    %c0_78 = arith.constant 0 : index
    %c0_79 = arith.constant 0 : index
    %255 = vector.load %arg11[%c0_78, %c0_79] : memref<16x32xf32, #tpu.memory_space<vmem>>, vector<16x32xf32>
    tpu.vector_store %arg11[%c0_78, %c0_79], %248 {strides = array<i32>} : memref<16x32xf32, #tpu.memory_space<vmem>>, vector<16x32xf32>,
    %c0_80 = arith.constant 0 : index
    %c0_81 = arith.constant 0 : index
    %256 = vector.load %arg12[%c0_80, %c0_81] : memref<16x32xf32, #tpu.memory_space<vmem>>, vector<16x32xf32>
    tpu.vector_store %arg12[%c0_80, %c0_81], %249 {strides = array<i32>} : memref<16x32xf32, #tpu.memory_space<vmem>>, vector<16x32xf32>,
    %c0_i32_82 = arith.constant 0 : i32
    %257 = arith.cmpi eq, %arg0, %c0_i32_82 : i32
    %258 = arith.extui %257 : i1 to i32
    %c0_i32_83 = arith.constant 0 : i32
    %259 = arith.cmpi ne, %258, %c0_i32_83 : i32
    scf.if %259 {
      %c0_84 = arith.constant 0 : index
      %c0_85 = arith.constant 0 : index
      %260 = vector.load %arg8[%c0_84, %c0_85] : memref<16x32xf32, #tpu.memory_space<vmem>>, vector<16x32xf32>
      tpu.vector_store %arg8[%c0_84, %c0_85], %248 {strides = array<i32>} : memref<16x32xf32, #tpu.memory_space<vmem>>, vector<16x32xf32>,
      %c0_86 = arith.constant 0 : index
      %c0_87 = arith.constant 0 : index
      %261 = vector.load %arg9[%c0_86, %c0_87] : memref<16x32xf32, #tpu.memory_space<vmem>>, vector<16x32xf32>
      tpu.vector_store %arg9[%c0_86, %c0_87], %249 {strides = array<i32>} : memref<16x32xf32, #tpu.memory_space<vmem>>, vector<16x32xf32>,
    } else {
    }
    return
  }
  func.func @transform_0(%arg0: i32) -> (i32, i32) {
    %c0_i32 = arith.constant 0 : i32
    %c0_i32_0 = arith.constant 0 : i32
    return %arg0, %c0_i32 : i32, i32
  }
  func.func @transform_1(%arg0: i32) -> (i32, i32) {
    %c0_i32 = arith.constant 0 : i32
    %c0_i32_0 = arith.constant 0 : i32
    %c0_i32_1 = arith.constant 0 : i32
    return %c0_i32, %c0_i32_0 : i32, i32
  }
  func.func @transform_2(%arg0: i32) -> (i32, i32) {
    %c0_i32 = arith.constant 0 : i32
    %c0_i32_0 = arith.constant 0 : i32
    %c0_i32_1 = arith.constant 0 : i32
    return %c0_i32, %c0_i32_0 : i32, i32
  }
  func.func @transform_3(%arg0: i32) -> (i32, i32) {
    %c0_i32 = arith.constant 0 : i32
    %c0_i32_0 = arith.constant 0 : i32
    %c0_i32_1 = arith.constant 0 : i32
    return %c0_i32, %c0_i32_0 : i32, i32
  }
  func.func @transform_4(%arg0: i32) -> (i32, i32) {
    %c0_i32 = arith.constant 0 : i32
    %c0_i32_0 = arith.constant 0 : i32
    %c0_i32_1 = arith.constant 0 : i32
    return %c0_i32, %c0_i32_0 : i32, i32
  }
  func.func @transform_5(%arg0: i32) -> (i32, i32) {
    %c0_i32 = arith.constant 0 : i32
    %c0_i32_0 = arith.constant 0 : i32
    %c0_i32_1 = arith.constant 0 : i32
    return %c0_i32, %c0_i32_0 : i32, i32
  }
  func.func @transform_6(%arg0: i32) -> (i32, i32, i32) {
    %c0_i32 = arith.constant 0 : i32
    %c0_i32_0 = arith.constant 0 : i32
    %c0_i32_1 = arith.constant 0 : i32
    return %arg0, %c0_i32, %c0_i32_0 : i32, i32, i32
  }
  func.func @transform_7(%arg0: i32) -> (i32, i32) {
    %c0_i32 = arith.constant 0 : i32
    %c0_i32_0 = arith.constant 0 : i32
    %c0_i32_1 = arith.constant 0 : i32
    return %c0_i32, %c0_i32_0 : i32, i32
  }
  func.func @transform_8(%arg0: i32) -> (i32, i32) {
    %c0_i32 = arith.constant 0 : i32
    %c0_i32_0 = arith.constant 0 : i32
    %c0_i32_1 = arith.constant 0 : i32
    return %c0_i32, %c0_i32_0 : i32, i32
  }
}

</mosaic_0001>

<llo_original>
// kernel: lstm_forward_pallas.1
$region0: #{lstm_forward_pallas.1}
  #allocation0 [shape = 'u32[]', space=smem, size = 0x4, offset = 0x4, fixed_abs, tag = 'smem constant byte address 0x4 - core index']
  #allocation1 [shape = 'u32[144,128]{1,0:T(1,128)}', space=vmem, size = 0x12000, scoped, tag = 'internal scratch']
  #allocation2 [shape = 'f32[128,128]{1,0:T(8,128)}', space=vmem, size = 0x10000, scoped, tag = 'scratch operand']
  #allocation3 [shape = 'f32[16,32]{1,0:T(8,128)}', space=vmem, size = 0x2000, scoped, tag = 'scratch operand']
  #allocation4 [shape = 'f32[16,32]{1,0:T(8,128)}', space=vmem, size = 0x2000, scoped, tag = 'scratch operand']
  %s0 = inlined_call_operand.vmem [shape: f32[128,2], index: 0, kind: input, shape index: {}]
  %s1 = inlined_call_operand.vmem [shape: f32[2,128], index: 1, kind: input, shape index: {}]
  %s2 = inlined_call_operand.vmem [shape: bf16[32,128], index: 2, kind: input, shape index: {}]
  %s3 = inlined_call_operand.vmem [shape: f32[1,128], index: 3, kind: input, shape index: {}]
  %s4 = inlined_call_operand.vmem [shape: f32[16,32], index: 4, kind: input, shape index: {}]
  %s5 = inlined_call_operand.vmem [shape: f32[16,32], index: 5, kind: input, shape index: {}]
  %s6 = inlined_call_operand.vmem [shape: f32[2,16,128], index: 6, kind: output, shape index: {0}]
  %s7 = inlined_call_operand.vmem [shape: f32[16,32], index: 7, kind: output, shape index: {1}]
  %s8 = inlined_call_operand.vmem [shape: f32[16,32], index: 8, kind: output, shape index: {2}]
  %9 = xla_tuple %s6, %s7, %s8
  %s10 = sld [smem:[#allocation0]]
  $region58: #{lstm_forward_pallas.1} parent=0
    _
  %s12 = ssub.s32 1, %s10
  %s13 = scalar_select 0, %s12, %s10
  // Predicated region
  $region2: #{lstm_forward_pallas.1} parent=0 // pred_check
    _
  $region3: #{lstm_forward_pallas.1} parent=0 // pred_check_branch
    %15 = sbr.rel (0) target = $region5
  $region4: #{lstm_forward_pallas.1} parent=0 // pred_region
    _
  $region5: #{lstm_forward_pallas.1} parent=0 // pred_fallthru
    _
  // Predicated region
  $region6: #{lstm_forward_pallas.1} parent=0 // pred_check
    _
  $region7: #{lstm_forward_pallas.1} parent=0 // pred_check_branch
    %17 = sbr.rel (0) target = $region9
  $region8: #{lstm_forward_pallas.1} parent=0 // pred_region
    _
  $region9: #{lstm_forward_pallas.1} parent=0 // pred_fallthru
    _
  // Predicated region
  $region10: #{lstm_forward_pallas.1} parent=0 // pred_check
    _
  $region11: #{lstm_forward_pallas.1} parent=0 // pred_check_branch
    %19 = sbr.rel (0) target = $region13
  $region12: #{lstm_forward_pallas.1} parent=0 // pred_region
    _
  $region13: #{lstm_forward_pallas.1} parent=0 // pred_fallthru
    _
  // Predicated region
  $region14: #{lstm_forward_pallas.1} parent=0 // pred_check
    _
  $region15: #{lstm_forward_pallas.1} parent=0 // pred_check_branch
    %21 = sbr.rel (0) target = $region17
  $region16: #{lstm_forward_pallas.1} parent=0 // pred_region
    _
  $region17: #{lstm_forward_pallas.1} parent=0 // pred_fallthru
    _
  // Predicated region
  $region18: #{lstm_forward_pallas.1} parent=0 // pred_check
    _
  $region19: #{lstm_forward_pallas.1} parent=0 // pred_check_branch
    %23 = sbr.rel (0) target = $region21
  $region20: #{lstm_forward_pallas.1} parent=0 // pred_region
    _
  $region21: #{lstm_forward_pallas.1} parent=0 // pred_fallthru
    _
  // Predicated region
  $region22: #{lstm_forward_pallas.1} parent=0 // pred_check
    _
  $region23: #{lstm_forward_pallas.1} parent=0 // pred_check_branch
    %25 = sbr.rel (0) target = $region25
  $region24: #{lstm_forward_pallas.1} parent=0 // pred_region
    _
  $region25: #{lstm_forward_pallas.1} parent=0 // pred_fallthru
    _
  %p27 = scmp.eq.s32.totalorder 0, 0
  // Predicated region
  $region26: #{lstm_forward_pallas.1} parent=0 // pred_check
    %p28 = pneg %p27
  $region27: #{lstm_forward_pallas.1} parent=0 // pred_check_branch
    %30 = sbr.rel (%p28) target = $region29
  $region28: #{lstm_forward_pallas.1} parent=0 // pred_region
    %v31 = vld [vmem:[%s4] sm:$0xff]
    %v32 = vld [vmem:[%s4 + $0x8] sm:$0xff]
    %vm33 = vcmask 261120
    %34 = vst.msk [vmem:[#allocation3] sm:$0xff] %vm33, %v31
    %35 = vst.msk [vmem:[#allocation3 + $0x8] sm:$0xff] %vm33, %v32
    %v36 = vld [vmem:[%s5] sm:$0xff]
    %v37 = vld [vmem:[%s5 + $0x8] sm:$0xff]
    %38 = vst.msk [vmem:[#allocation4] sm:$0xff] %vm33, %v36
    %39 = vst.msk [vmem:[#allocation4 + $0x8] sm:$0xff] %vm33, %v37
  $region29: #{lstm_forward_pallas.1} parent=0 // pred_fallthru
    _
  %v40 = vld [vmem:[%s0] sm:$0xff]
  %v41 = vld [vmem:[%s0 + $0x8] sm:$0xff]
  %v42 = vld [vmem:[%s0 + $0x10] sm:$0xff]
  %v43 = vld [vmem:[%s0 + $0x18] sm:$0xff]
  %v44 = vld [vmem:[%s0 + $0x20] sm:$0xff]
  %v45 = vld [vmem:[%s0 + $0x28] sm:$0xff]
  %v46 = vld [vmem:[%s0 + $0x30] sm:$0xff]
  %v47 = vld [vmem:[%s0 + $0x38] sm:$0xff]
  %v48 = vld [vmem:[%s0 + $0x40] sm:$0xff]
  %v49 = vld [vmem:[%s0 + $0x48] sm:$0xff]
  %v50 = vld [vmem:[%s0 + $0x50] sm:$0xff]
  %v51 = vld [vmem:[%s0 + $0x58] sm:$0xff]
  %v52 = vld [vmem:[%s0 + $0x60] sm:$0xff]
  %v53 = vld [vmem:[%s0 + $0x68] sm:$0xff]
  %v54 = vld [vmem:[%s0 + $0x70] sm:$0xff]
  %v55 = vld [vmem:[%s0 + $0x78] sm:$0xff]
  %v56 = vld [vmem:[%s1] sm:$0x3]
  %v57 = vld [vmem:[%s3] sm:$0x1]
  %v59 = vlaneseq
  %v60 = vshrl.u32 %v59, 7
  %v61 = vsub.s32 0, %v60
  %v62 = vrot.slane %v57, %v61
  %vm64 = vcmask 15360
  %v66 = vsel %vm64, %v40, 0
  %v69 = vsel %vm64, %v41, 0
  %v72 = vsel %vm64, %v42, 0
  %v75 = vsel %vm64, %v43, 0
  %v78 = vsel %vm64, %v44, 0
  %v81 = vsel %vm64, %v45, 0
  %v84 = vsel %vm64, %v46, 0
  %v87 = vsel %vm64, %v47, 0
  %v90 = vsel %vm64, %v48, 0
  %v93 = vsel %vm64, %v49, 0
  %v96 = vsel %vm64, %v50, 0
  %v99 = vsel %vm64, %v51, 0
  %v102 = vsel %vm64, %v52, 0
  %v105 = vsel %vm64, %v53, 0
  %v108 = vsel %vm64, %v54, 0
  %v111 = vsel %vm64, %v55, 0
  %vm113 = vcmask 1041408
  %v115 = vsel %vm113, %v56, 0
  %117 = vmatprep.subr.mxu0 0.0
  %118 = vmatpush1.msra.mxu0 0.0
  %119 = vmatprep.subr.mxu0 0.0
  %120 = vmatpush1.msra.mxu0 0.0
  %121 = vmatprep.subr.mxu0 0.0
  %122 = vmatpush1.msra.mxu0 0.0
  %123 = vmatprep.subr.mxu0 0.0
  %124 = vmatpush1.msra.mxu0 0.0
  %125 = vmatprep.subr.mxu0 0.0
  %126 = vmatpush1.msra.mxu0 0.0
  %127 = vmatprep.subr.mxu0 0.0
  %128 = vmatpush1.msra.mxu0 0.0
  %129 = vmatprep.subr.mxu0 0.0
  %130 = vmatpush1.msra.mxu0 0.0
  %131 = vmatprep.subr.mxu0 0.0
  %132 = vmatpush1.msra.mxu0 0.0
  %133 = vmatprep.subr.mxu0 0.0
  %134 = vmatpush1.msra.mxu0 0.0
  %135 = vmatprep.subr.mxu0 0.0
  %136 = vmatpush1.msra.mxu0 0.0
  %137 = vmatprep.subr.mxu0 0.0
  %138 = vmatpush1.msra.mxu0 0.0
  %139 = vmatprep.subr.mxu0 0.0
  %140 = vmatpush1.msra.mxu0 0.0
  %141 = vmatprep.subr.mxu0 0.0
  %142 = vmatpush1.msra.mxu0 0.0
  %143 = vmatprep.subr.mxu0 0.0
  %144 = vmatpush1.msra.mxu0 0.0
  %145 = vmatprep.subr.mxu0 0.0
  %146 = vmatpush1.msra.mxu0 0.0
  %147 = vmatprep.subr.mxu0 0.0
  %148 = vmatpush1.msra.mxu0 %v115
  %149 = vmatprep.subr.mxu0 0.0
  %150 = vmatpush2.msra.mxu0 0.0
  %151 = vmatprep.subr.mxu0 0.0
  %152 = vmatpush2.msra.mxu0 0.0
  %153 = vmatprep.subr.mxu0 0.0
  %154 = vmatpush2.msra.mxu0 0.0
  %155 = vmatprep.subr.mxu0 0.0
  %156 = vmatpush2.msra.mxu0 0.0
  %157 = vmatprep.subr.mxu0 0.0
  %158 = vmatpush2.msra.mxu0 0.0
  %159 = vmatprep.subr.mxu0 0.0
  %160 = vmatpush2.msra.mxu0 0.0
  %161 = vmatprep.subr.mxu0 0.0
  %162 = vmatpush2.msra.mxu0 0.0
  %163 = vmatprep.subr.mxu0 0.0
  %164 = vmatpush2.msra.mxu0 0.0
  %165 = vmatprep.subr.mxu0 0.0
  %166 = vmatpush2.msra.mxu0 0.0
  %167 = vmatprep.subr.mxu0 0.0
  %168 = vmatpush2.msra.mxu0 0.0
  %169 = vmatprep.subr.mxu0 0.0
  %170 = vmatpush2.msra.mxu0 0.0
  %171 = vmatprep.subr.mxu0 0.0
  %172 = vmatpush2.msra.mxu0 0.0
  %173 = vmatprep.subr.mxu0 0.0
  %174 = vmatpush2.msra.mxu0 0.0
  %175 = vmatprep.subr.mxu0 0.0
  %176 = vmatpush2.msra.mxu0 0.0
  %177 = vmatprep.subr.mxu0 0.0
  %178 = vmatpush2.msra.mxu0 0.0
  %179 = vmatprep.subr.mxu0 0.0
  %180 = vmatpush2.msra.mxu0 0.0
  %181 = vmatprep.mubr.f32.mxu0 0.0
  %182 = vmatmul.mubr.f32.gmra.mxu0 %v66
  %v183 = vpop.f32.mrf.mxu0
  %v184 = vadd.f32 %v62, %v183
  %v185 = vpop.f32.mrf.mxu0
  %186 = vmatprep.mubr.f32.mxu0 0.0
  %187 = vmatmul.mubr.f32.gmra.mxu0 %v69
  %v188 = vpop.f32.mrf.mxu0
  %v189 = vadd.f32 %v62, %v188
  %v190 = vpop.f32.mrf.mxu0
  %191 = vmatprep.mubr.f32.mxu0 0.0
  %192 = vmatmul.mubr.f32.gmra.mxu0 %v72
  %v193 = vpop.f32.mrf.mxu0
  %v194 = vadd.f32 %v62, %v193
  %v195 = vpop.f32.mrf.mxu0
  %196 = vmatprep.mubr.f32.mxu0 0.0
  %197 = vmatmul.mubr.f32.gmra.mxu0 %v75
  %v198 = vpop.f32.mrf.mxu0
  %v199 = vadd.f32 %v62, %v198
  %v200 = vpop.f32.mrf.mxu0
  %201 = vmatprep.mubr.f32.mxu0 0.0
  %202 = vmatmul.mubr.f32.gmra.mxu0 %v78
  %v203 = vpop.f32.mrf.mxu0
  %v204 = vadd.f32 %v62, %v203
  %v205 = vpop.f32.mrf.mxu0
  %206 = vmatprep.mubr.f32.mxu0 0.0
  %207 = vmatmul.mubr.f32.gmra.mxu0 %v81
  %v208 = vpop.f32.mrf.mxu0
  %v209 = vadd.f32 %v62, %v208
  %v210 = vpop.f32.mrf.mxu0
  %211 = vmatprep.mubr.f32.mxu0 0.0
  %212 = vmatmul.mubr.f32.gmra.mxu0 %v84
  %v213 = vpop.f32.mrf.mxu0
  %v214 = vadd.f32 %v62, %v213
  %v215 = vpop.f32.mrf.mxu0
  %216 = vmatprep.mubr.f32.mxu0 0.0
  %217 = vmatmul.mubr.f32.gmra.mxu0 %v87
  %v218 = vpop.f32.mrf.mxu0
  %v219 = vadd.f32 %v62, %v218
  %v220 = vpop.f32.mrf.mxu0
  %221 = vmatprep.mubr.f32.mxu0 0.0
  %222 = vmatmul.mubr.f32.gmra.mxu0 %v90
  %v223 = vpop.f32.mrf.mxu0
  %v224 = vadd.f32 %v62, %v223
  %v225 = vpop.f32.mrf.mxu0
  %226 = vmatprep.mubr.f32.mxu0 0.0
  %227 = vmatmul.mubr.f32.gmra.mxu0 %v93
  %v228 = vpop.f32.mrf.mxu0
  %v229 = vadd.f32 %v62, %v228
  %v230 = vpop.f32.mrf.mxu0
  %231 = vmatprep.mubr.f32.mxu0 0.0
  %232 = vmatmul.mubr.f32.gmra.mxu0 %v96
  %v233 = vpop.f32.mrf.mxu0
  %v234 = vadd.f32 %v62, %v233
  %v235 = vpop.f32.mrf.mxu0
  %236 = vmatprep.mubr.f32.mxu0 0.0
  %237 = vmatmul.mubr.f32.gmra.mxu0 %v99
  %v238 = vpop.f32.mrf.mxu0
  %v239 = vadd.f32 %v62, %v238
  %v240 = vpop.f32.mrf.mxu0
  %241 = vmatprep.mubr.f32.mxu0 0.0
  %242 = vmatmul.mubr.f32.gmra.mxu0 %v102
  %v243 = vpop.f32.mrf.mxu0
  %v244 = vadd.f32 %v62, %v243
  %v245 = vpop.f32.mrf.mxu0
  %246 = vmatprep.mubr.f32.mxu0 0.0
  %247 = vmatmul.mubr.f32.gmra.mxu0 %v105
  %v248 = vpop.f32.mrf.mxu0
  %v249 = vadd.f32 %v62, %v248
  %v250 = vpop.f32.mrf.mxu0
  %251 = vmatprep.mubr.f32.mxu0 0.0
  %252 = vmatmul.mubr.f32.gmra.mxu0 %v108
  %v253 = vpop.f32.mrf.mxu0
  %v254 = vadd.f32 %v62, %v253
  %v255 = vpop.f32.mrf.mxu0
  %256 = vmatprep.mubr.f32.mxu0 0.0
  %257 = vmatmul.mubr.f32.gmra.mxu0 %v111
  %v258 = vpop.f32.mrf.mxu0
  %v259 = vadd.f32 %v62, %v258
  %v260 = vpop.f32.mrf.mxu0
  %261 = vdwg.mxu0
  %262 = vst [vmem:[#allocation2] sm:$0xff] %v184
  %263 = vst [vmem:[#allocation2 + $0x8] sm:$0xff] %v189
  %264 = vst [vmem:[#allocation2 + $0x10] sm:$0xff] %v194
  %265 = vst [vmem:[#allocation2 + $0x18] sm:$0xff] %v199
  %266 = vst [vmem:[#allocation2 + $0x20] sm:$0xff] %v204
  %267 = vst [vmem:[#allocation2 + $0x28] sm:$0xff] %v209
  %268 = vst [vmem:[#allocation2 + $0x30] sm:$0xff] %v214
  %269 = vst [vmem:[#allocation2 + $0x38] sm:$0xff] %v219
  %270 = vst [vmem:[#allocation2 + $0x40] sm:$0xff] %v224
  %271 = vst [vmem:[#allocation2 + $0x48] sm:$0xff] %v229
  %272 = vst [vmem:[#allocation2 + $0x50] sm:$0xff] %v234
  %273 = vst [vmem:[#allocation2 + $0x58] sm:$0xff] %v239
  %274 = vst [vmem:[#allocation2 + $0x60] sm:$0xff] %v244
  %275 = vst [vmem:[#allocation2 + $0x68] sm:$0xff] %v249
  %276 = vst [vmem:[#allocation2 + $0x70] sm:$0xff] %v254
  %277 = vst [vmem:[#allocation2 + $0x78] sm:$0xff] %v259
  %v278 = vld [vmem:[%s2] sm:$0xf]
  %v279 = vld [vmem:[%s2 + $0x4] sm:$0xf]
  %v280 = vld [vmem:[%s2 + $0x8] sm:$0xf]
  %v281 = vld [vmem:[%s2 + $0xc] sm:$0xf]
  %v282 = vld [vmem:[#allocation3] sm:$0xff]
  %v283 = vld [vmem:[#allocation3 + $0x8] sm:$0xff]
  %v284 = vld [vmem:[#allocation4] sm:$0xff]
  %v285 = vld [vmem:[#allocation4 + $0x8] sm:$0xff]
  %v286 = vld [vmem:[#allocation2] sm:$0xff]
  %v287 = vld [vmem:[#allocation2 + $0x8] sm:$0xff]
  %v288 = vpack.c.bf16 %v283, %v282
  %v293 = vunpack.c.l.b16 %v278
  %v294 = vunpack.c.l.b16 %v279
  %v295 = vunpack.c.l.b16 %v280
  %v296 = vunpack.c.l.b16 %v281
  %v297 = vpack.c.b16 %v294, %v293
  %v298 = vpack.c.b16 %v296, %v295
  %vm301 = vcmask 261120
  %v303 = vsel %vm301, %v288, 0
  %305 = vmatprep.subr.bf16.mxu0 0
  %306 = vmatpush1.bf16.msra.mxu0 0
  %307 = vmatprep.subr.bf16.mxu0 0
  %308 = vmatpush1.bf16.msra.mxu0 0
  %309 = vmatprep.subr.bf16.mxu0 0
  %310 = vmatpush1.bf16.msra.mxu0 0
  %311 = vmatprep.subr.bf16.mxu0 0
  %312 = vmatpush1.bf16.msra.mxu0 0
  %313 = vmatprep.subr.bf16.mxu0 0
  %314 = vmatpush1.bf16.msra.mxu0 0
  %315 = vmatprep.subr.bf16.mxu0 0
  %316 = vmatpush1.bf16.msra.mxu0 0
  %317 = vmatprep.subr.bf16.mxu0 0
  %318 = vmatpush1.bf16.msra.mxu0 %v298
  %319 = vmatprep.subr.bf16.mxu0 0
  %320 = vmatpush1.bf16.msra.mxu0 %v297
  %321 = vmatprep.subr.bf16.mxu0 0
  %322 = vmatpush2.bf16.msra.mxu0 0
  %323 = vmatprep.subr.bf16.mxu0 0
  %324 = vmatpush2.bf16.msra.mxu0 0
  %325 = vmatprep.subr.bf16.mxu0 0
  %326 = vmatpush2.bf16.msra.mxu0 0
  %327 = vmatprep.subr.bf16.mxu0 0
  %328 = vmatpush2.bf16.msra.mxu0 0
  %329 = vmatprep.subr.bf16.mxu0 0
  %330 = vmatpush2.bf16.msra.mxu0 0
  %331 = vmatprep.subr.bf16.mxu0 0
  %332 = vmatpush2.bf16.msra.mxu0 0
  %333 = vmatprep.subr.bf16.mxu0 0
  %334 = vmatpush2.bf16.msra.mxu0 0
  %335 = vmatprep.subr.bf16.mxu0 0
  %336 = vmatpush2.bf16.msra.mxu0 0
  %337 = vmatprep.mubr.bf16.mxu0 0
  %338 = vmatmul.mubr.bf16.gmra.mxu0 %v303
  %v339 = vpop.f32.mrf.mxu0
  %v340 = vadd.f32 0.0, %v339
  %v341 = vpop.f32.mrf.mxu0
  %v342 = vpop.f32.mrf.mxu0
  %v343 = vadd.f32 0.0, %v342
  %v344 = vpop.f32.mrf.mxu0
  %345 = vdwg.mxu0
  %v346 = vadd.f32 %v286, %v340
  %v347 = vadd.f32 %v287, %v343
  %v348 = vxor.u32 %v346, 2147483648
  %v349 = vxor.u32 %v347, 2147483648
  %v350 = vmul.f32 %v348, 1.442695
  %v351 = vpow.pop %v350
  %v352 = vmul.f32 %v349, 1.442695
  %v353 = vpow.pop %v352
  %v354 = vadd.f32 %v351, 1.0
  %v355 = vadd.f32 %v353, 1.0
  %v356 = vrcp.pop %v354
  %v357 = vmul.f32 1.0, %v356
  %v358 = vrcp.pop %v355
  %v359 = vmul.f32 1.0, %v358
  %v360 = vtanh.pop %v346
  %v361 = vtanh.pop %v347
  %364 = vrot.lane.b32.xlu0 %v284, 32
  %v365 = vpop.permute.xlu0 %364
  %366 = vrot.lane.b32.xlu0 %v285, 32
  %v367 = vpop.permute.xlu0 %366
  %v370 = vmul.f32 %v357, %v365
  %v371 = vmul.f32 %v359, %v367
  %374 = vrot.lane.b32.xlu0 %v360, 64
  %v375 = vpop.permute.xlu0 %374
  %376 = vrot.lane.b32.xlu0 %v361, 64
  %v377 = vpop.permute.xlu0 %376
  %v380 = vmul.f32 %v357, %v375
  %v381 = vmul.f32 %v359, %v377
  %384 = vrot.lane.b32.xlu0 %v380, 32
  %v385 = vpop.permute.xlu0 %384
  %386 = vrot.lane.b32.xlu0 %v381, 32
  %v387 = vpop.permute.xlu0 %386
  %v390 = vadd.f32 %v370, %v385
  %v391 = vadd.f32 %v371, %v387
  %v392 = vtanh.pop %v390
  %v393 = vtanh.pop %v391
  %396 = vrot.lane.b32.xlu0 %v392, 64
  %v397 = vpop.permute.xlu0 %396
  %398 = vrot.lane.b32.xlu0 %v393, 64
  %v399 = vpop.permute.xlu0 %398
  %v402 = vmul.f32 %v357, %v397
  %v403 = vmul.f32 %v359, %v399
  %s404 = smul.u32 0, 8
  %p405 = scmp.lt.s32.totalorder %s404, 5
  %s406 = scalar_select %p405, 1, 0
  %v407 = vstv %s406
  %vm408 = vcmp.eq.s32.totalorder %v407, 1
  %411 = vrot.lane.b32.xlu0 %v282, 96
  %v412 = vpop.permute.xlu0 %411
  %413 = vrot.lane.b32.xlu0 %v283, 96
  %v414 = vpop.permute.xlu0 %413
  %v417 = vsel %vm408, %v402, %v412
  %v418 = vsel %vm408, %v403, %v414
  %v419 = vsel %vm408, %v390, %v365
  %v420 = vsel %vm408, %v391, %v367
  %s421 = scalar_lea.vmem [#allocation2], 16
  %v422 = vld [vmem:[%s421] sm:$0xff]
  %v423 = vld [vmem:[%s421 + $0x8] sm:$0xff]
  %v424 = vpack.c.bf16 %v418, %v417
  %426 = vrot.lane.b32.xlu0 %v424, 32
  %v427 = vpop.permute.xlu0 %426
  %v429 = vsel %vm301, %v427, 0
  %431 = vmatprep.subr.bf16.mxu0 0
  %432 = vmatpush1.bf16.msra.mxu0 0
  %433 = vmatprep.subr.bf16.mxu0 0
  %434 = vmatpush1.bf16.msra.mxu0 0
  %435 = vmatprep.subr.bf16.mxu0 0
  %436 = vmatpush1.bf16.msra.mxu0 0
  %437 = vmatprep.subr.bf16.mxu0 0
  %438 = vmatpush1.bf16.msra.mxu0 0
  %439 = vmatprep.subr.bf16.mxu0 0
  %440 = vmatpush1.bf16.msra.mxu0 0
  %441 = vmatprep.subr.bf16.mxu0 0
  %442 = vmatpush1.bf16.msra.mxu0 0
  %443 = vmatprep.subr.bf16.mxu0 0
  %444 = vmatpush1.bf16.msra.mxu0 %v298
  %445 = vmatprep.subr.bf16.mxu0 0
  %446 = vmatpush1.bf16.msra.mxu0 %v297
  %447 = vmatprep.subr.bf16.mxu0 0
  %448 = vmatpush2.bf16.msra.mxu0 0
  %449 = vmatprep.subr.bf16.mxu0 0
  %450 = vmatpush2.bf16.msra.mxu0 0
  %451 = vmatprep.subr.bf16.mxu0 0
  %452 = vmatpush2.bf16.msra.mxu0 0
  %453 = vmatprep.subr.bf16.mxu0 0
  %454 = vmatpush2.bf16.msra.mxu0 0
  %455 = vmatprep.subr.bf16.mxu0 0
  %456 = vmatpush2.bf16.msra.mxu0 0
  %457 = vmatprep.subr.bf16.mxu0 0
  %458 = vmatpush2.bf16.msra.mxu0 0
  %459 = vmatprep.subr.bf16.mxu0 0
  %460 = vmatpush2.bf16.msra.mxu0 0
  %461 = vmatprep.subr.bf16.mxu0 0
  %462 = vmatpush2.bf16.msra.mxu0 0
  %463 = vmatprep.mubr.bf16.mxu0 0
  %464 = vmatmul.mubr.bf16.gmra.mxu0 %v429
  %v465 = vpop.f32.mrf.mxu0
  %v466 = vadd.f32 0.0, %v465
  %v467 = vpop.f32.mrf.mxu0
  %v468 = vpop.f32.mrf.mxu0
  %v469 = vadd.f32 0.0, %v468
  %v470 = vpop.f32.mrf.mxu0
  %471 = vdwg.mxu0
  %v472 = vadd.f32 %v422, %v466
  %v473 = vadd.f32 %v423, %v469
  %v474 = vxor.u32 %v472, 2147483648
  %v475 = vxor.u32 %v473, 2147483648
  %v476 = vmul.f32 %v474, 1.442695
  %v477 = vpow.pop %v476
  %v478 = vmul.f32 %v475, 1.442695
  %v479 = vpow.pop %v478
  %v480 = vadd.f32 %v477, 1.0
  %v481 = vadd.f32 %v479, 1.0
  %v482 = vrcp.pop %v480
  %v483 = vmul.f32 1.0, %v482
  %v484 = vrcp.pop %v481
  %v485 = vmul.f32 1.0, %v484
  %v486 = vtanh.pop %v472
  %v487 = vtanh.pop %v473
  %v488 = vmul.f32 %v483, %v419
  %v489 = vmul.f32 %v485, %v420
  %492 = vrot.lane.b32.xlu0 %v486, 64
  %v493 = vpop.permute.xlu0 %492
  %494 = vrot.lane.b32.xlu0 %v487, 64
  %v495 = vpop.permute.xlu0 %494
  %v498 = vmul.f32 %v483, %v493
  %v499 = vmul.f32 %v485, %v495
  %502 = vrot.lane.b32.xlu0 %v498, 32
  %v503 = vpop.permute.xlu0 %502
  %504 = vrot.lane.b32.xlu0 %v499, 32
  %v505 = vpop.permute.xlu0 %504
  %v508 = vadd.f32 %v488, %v503
  %v509 = vadd.f32 %v489, %v505
  %v510 = vtanh.pop %v508
  %v511 = vtanh.pop %v509
  %514 = vrot.lane.b32.xlu0 %v510, 64
  %v515 = vpop.permute.xlu0 %514
  %516 = vrot.lane.b32.xlu0 %v511, 64
  %v517 = vpop.permute.xlu0 %516
  %v520 = vmul.f32 %v483, %v515
  %v521 = vmul.f32 %v485, %v517
  %s522 = sadd.s32 %s404, 1
  %p523 = scmp.lt.s32.totalorder %s522, 5
  %s524 = scalar_select %p523, 1, 0
  %v525 = vstv %s524
  %vm526 = vcmp.eq.s32.totalorder %v525, 1
  %v527 = vsel %vm526, %v520, %v417
  %v528 = vsel %vm526, %v521, %v418
  %v529 = vsel %vm526, %v508, %v419
  %v530 = vsel %vm526, %v509, %v420
  %s531 = scalar_lea.vmem [#allocation2], 32
  %v532 = vld [vmem:[%s531] sm:$0xff]
  %v533 = vld [vmem:[%s531 + $0x8] sm:$0xff]
  %v534 = vpack.c.bf16 %v528, %v527
  %536 = vrot.lane.b32.xlu0 %v534, 32
  %v537 = vpop.permute.xlu0 %536
  %v539 = vsel %vm301, %v537, 0
  %541 = vmatprep.subr.bf16.mxu0 0
  %542 = vmatpush1.bf16.msra.mxu0 0
  %543 = vmatprep.subr.bf16.mxu0 0
  %544 = vmatpush1.bf16.msra.mxu0 0
  %545 = vmatprep.subr.bf16.mxu0 0
  %546 = vmatpush1.bf16.msra.mxu0 0
  %547 = vmatprep.subr.bf16.mxu0 0
  %548 = vmatpush1.bf16.msra.mxu0 0
  %549 = vmatprep.subr.bf16.mxu0 0
  %550 = vmatpush1.bf16.msra.mxu0 0
  %551 = vmatprep.subr.bf16.mxu0 0
  %552 = vmatpush1.bf16.msra.mxu0 0
  %553 = vmatprep.subr.bf16.mxu0 0
  %554 = vmatpush1.bf16.msra.mxu0 %v298
  %555 = vmatprep.subr.bf16.mxu0 0
  %556 = vmatpush1.bf16.msra.mxu0 %v297
  %557 = vmatprep.subr.bf16.mxu0 0
  %558 = vmatpush2.bf16.msra.mxu0 0
  %559 = vmatprep.subr.bf16.mxu0 0
  %560 = vmatpush2.bf16.msra.mxu0 0
  %561 = vmatprep.subr.bf16.mxu0 0
  %562 = vmatpush2.bf16.msra.mxu0 0
  %563 = vmatprep.subr.bf16.mxu0 0
  %564 = vmatpush2.bf16.msra.mxu0 0
  %565 = vmatprep.subr.bf16.mxu0 0
  %566 = vmatpush2.bf16.msra.mxu0 0
  %567 = vmatprep.subr.bf16.mxu0 0
  %568 = vmatpush2.bf16.msra.mxu0 0
  %569 = vmatprep.subr.bf16.mxu0 0
  %570 = vmatpush2.bf16.msra.mxu0 0
  %571 = vmatprep.subr.bf16.mxu0 0
  %572 = vmatpush2.bf16.msra.mxu0 0
  %573 = vmatprep.mubr.bf16.mxu0 0
  %574 = vmatmul.mubr.bf16.gmra.mxu0 %v539
  %v575 = vpop.f32.mrf.mxu0
  %v576 = vadd.f32 0.0, %v575
  %v577 = vpop.f32.mrf.mxu0
  %v578 = vpop.f32.mrf.mxu0
  %v579 = vadd.f32 0.0, %v578
  %v580 = vpop.f32.mrf.mxu0
  %581 = vdwg.mxu0
  %v582 = vadd.f32 %v532, %v576
  %v583 = vadd.f32 %v533, %v579
  %v584 = vxor.u32 %v582, 2147483648
  %v585 = vxor.u32 %v583, 2147483648
  %v586 = vmul.f32 %v584, 1.442695
  %v587 = vpow.pop %v586
  %v588 = vmul.f32 %v585, 1.442695
  %v589 = vpow.pop %v588
  %v590 = vadd.f32 %v587, 1.0
  %v591 = vadd.f32 %v589, 1.0
  %v592 = vrcp.pop %v590
  %v593 = vmul.f32 1.0, %v592
  %v594 = vrcp.pop %v591
  %v595 = vmul.f32 1.0, %v594
  %v596 = vtanh.pop %v582
  %v597 = vtanh.pop %v583
  %v598 = vmul.f32 %v593, %v529
  %v599 = vmul.f32 %v595, %v530
  %602 = vrot.lane.b32.xlu0 %v596, 64
  %v603 = vpop.permute.xlu0 %602
  %604 = vrot.lane.b32.xlu0 %v597, 64
  %v605 = vpop.permute.xlu0 %604
  %v608 = vmul.f32 %v593, %v603
  %v609 = vmul.f32 %v595, %v605
  %612 = vrot.lane.b32.xlu0 %v608, 32
  %v613 = vpop.permute.xlu0 %612
  %614 = vrot.lane.b32.xlu0 %v609, 32
  %v615 = vpop.permute.xlu0 %614
  %v618 = vadd.f32 %v598, %v613
  %v619 = vadd.f32 %v599, %v615
  %v620 = vtanh.pop %v618
  %v621 = vtanh.pop %v619
  %624 = vrot.lane.b32.xlu0 %v620, 64
  %v625 = vpop.permute.xlu0 %624
  %626 = vrot.lane.b32.xlu0 %v621, 64
  %v627 = vpop.permute.xlu0 %626
  %v630 = vmul.f32 %v593, %v625
  %v631 = vmul.f32 %v595, %v627
  %s632 = sadd.s32 %s404, 2
  %p633 = scmp.lt.s32.totalorder %s632, 5
  %s634 = scalar_select %p633, 1, 0
  %v635 = vstv %s634
  %vm636 = vcmp.eq.s32.totalorder %v635, 1
  %v637 = vsel %vm636, %v630, %v527
  %v638 = vsel %vm636, %v631, %v528
  %v639 = vsel %vm636, %v618, %v529
  %v640 = vsel %vm636, %v619, %v530
  %s641 = scalar_lea.vmem [#allocation2], 48
  %v642 = vld [vmem:[%s641] sm:$0xff]
  %v643 = vld [vmem:[%s641 + $0x8] sm:$0xff]
  %v644 = vpack.c.bf16 %v638, %v637
  %646 = vrot.lane.b32.xlu0 %v644, 32
  %v647 = vpop.permute.xlu0 %646
  %v649 = vsel %vm301, %v647, 0
  %651 = vmatprep.subr.bf16.mxu0 0
  %652 = vmatpush1.bf16.msra.mxu0 0
  %653 = vmatprep.subr.bf16.mxu0 0
  %654 = vmatpush1.bf16.msra.mxu0 0
  %655 = vmatprep.subr.bf16.mxu0 0
  %656 = vmatpush1.bf16.msra.mxu0 0
  %657 = vmatprep.subr.bf16.mxu0 0
  %658 = vmatpush1.bf16.msra.mxu0 0
  %659 = vmatprep.subr.bf16.mxu0 0
  %660 = vmatpush1.bf16.msra.mxu0 0
  %661 = vmatprep.subr.bf16.mxu0 0
  %662 = vmatpush1.bf16.msra.mxu0 0
  %663 = vmatprep.subr.bf16.mxu0 0
  %664 = vmatpush1.bf16.msra.mxu0 %v298
  %665 = vmatprep.subr.bf16.mxu0 0
  %666 = vmatpush1.bf16.msra.mxu0 %v297
  %667 = vmatprep.subr.bf16.mxu0 0
  %668 = vmatpush2.bf16.msra.mxu0 0
  %669 = vmatprep.subr.bf16.mxu0 0
  %670 = vmatpush2.bf16.msra.mxu0 0
  %671 = vmatprep.subr.bf16.mxu0 0
  %672 = vmatpush2.bf16.msra.mxu0 0
  %673 = vmatprep.subr.bf16.mxu0 0
  %674 = vmatpush2.bf16.msra.mxu0 0
  %675 = vmatprep.subr.bf16.mxu0 0
  %676 = vmatpush2.bf16.msra.mxu0 0
  %677 = vmatprep.subr.bf16.mxu0 0
  %678 = vmatpush2.bf16.msra.mxu0 0
  %679 = vmatprep.subr.bf16.mxu0 0
  %680 = vmatpush2.bf16.msra.mxu0 0
  %681 = vmatprep.subr.bf16.mxu0 0
  %682 = vmatpush2.bf16.msra.mxu0 0
  %683 = vmatprep.mubr.bf16.mxu0 0
  %684 = vmatmul.mubr.bf16.gmra.mxu0 %v649
  %v685 = vpop.f32.mrf.mxu0
  %v686 = vadd.f32 0.0, %v685
  %v687 = vpop.f32.mrf.mxu0
  %v688 = vpop.f32.mrf.mxu0
  %v689 = vadd.f32 0.0, %v688
  %v690 = vpop.f32.mrf.mxu0
  %691 = vdwg.mxu0
  %v692 = vadd.f32 %v642, %v686
  %v693 = vadd.f32 %v643, %v689
  %v694 = vxor.u32 %v692, 2147483648
  %v695 = vxor.u32 %v693, 2147483648
  %v696 = vmul.f32 %v694, 1.442695
  %v697 = vpow.pop %v696
  %v698 = vmul.f32 %v695, 1.442695
  %v699 = vpow.pop %v698
  %v700 = vadd.f32 %v697, 1.0
  %v701 = vadd.f32 %v699, 1.0
  %v702 = vrcp.pop %v700
  %v703 = vmul.f32 1.0, %v702
  %v704 = vrcp.pop %v701
  %v705 = vmul.f32 1.0, %v704
  %v706 = vtanh.pop %v692
  %v707 = vtanh.pop %v693
  %v708 = vmul.f32 %v703, %v639
  %v709 = vmul.f32 %v705, %v640
  %712 = vrot.lane.b32.xlu0 %v706, 64
  %v713 = vpop.permute.xlu0 %712
  %714 = vrot.lane.b32.xlu0 %v707, 64
  %v715 = vpop.permute.xlu0 %714
  %v718 = vmul.f32 %v703, %v713
  %v719 = vmul.f32 %v705, %v715
  %722 = vrot.lane.b32.xlu0 %v718, 32
  %v723 = vpop.permute.xlu0 %722
  %724 = vrot.lane.b32.xlu0 %v719, 32
  %v725 = vpop.permute.xlu0 %724
  %v728 = vadd.f32 %v708, %v723
  %v729 = vadd.f32 %v709, %v725
  %v730 = vtanh.pop %v728
  %v731 = vtanh.pop %v729
  %734 = vrot.lane.b32.xlu0 %v730, 64
  %v735 = vpop.permute.xlu0 %734
  %736 = vrot.lane.b32.xlu0 %v731, 64
  %v737 = vpop.permute.xlu0 %736
  %v740 = vmul.f32 %v703, %v735
  %v741 = vmul.f32 %v705, %v737
  %s742 = sadd.s32 %s404, 3
  %p743 = scmp.lt.s32.totalorder %s742, 5
  %s744 = scalar_select %p743, 1, 0
  %v745 = vstv %s744
  %vm746 = vcmp.eq.s32.totalorder %v745, 1
  %v747 = vsel %vm746, %v740, %v637
  %v748 = vsel %vm746, %v741, %v638
  %v749 = vsel %vm746, %v728, %v639
  %v750 = vsel %vm746, %v729, %v640
  %753 = vrot.lane.b32.xlu0 %v402, 32
  %v754 = vpop.permute.xlu0 %753
  %755 = vrot.lane.b32.xlu0 %v403, 32
  %v756 = vpop.permute.xlu0 %755
  %761 = vrot.lane.b32.xlu0 %v520, 64
  %v762 = vpop.permute.xlu0 %761
  %763 = vrot.lane.b32.xlu0 %v521, 64
  %v764 = vpop.permute.xlu0 %763
  %769 = vrot.lane.b32.xlu0 %v630, 96
  %v770 = vpop.permute.xlu0 %769
  %771 = vrot.lane.b32.xlu0 %v631, 96
  %v772 = vpop.permute.xlu0 %771
  %v775 = vsel %vm301, %v754, %v762
  %v776 = vsel %vm301, %v756, %v764
  %vm777 = vcmask 523264
  %v778 = vsel %vm777, %v775, %v770
  %v779 = vsel %vm777, %v776, %v772
  %vm780 = vcmask 785408
  %v781 = vsel %vm780, %v778, %v740
  %v782 = vsel %vm780, %v779, %v741
  %783 = vst [vmem:[%s6] sm:$0xff] %v781
  %784 = vst [vmem:[%s6 + $0x8] sm:$0xff] %v782
  %s785 = scalar_lea.vmem [#allocation2], 64
  %v786 = vld [vmem:[%s785] sm:$0xff]
  %v787 = vld [vmem:[%s785 + $0x8] sm:$0xff]
  %v788 = vpack.c.bf16 %v748, %v747
  %790 = vrot.lane.b32.xlu0 %v788, 32
  %v791 = vpop.permute.xlu0 %790
  %v793 = vsel %vm301, %v791, 0
  %795 = vmatprep.subr.bf16.mxu0 0
  %796 = vmatpush1.bf16.msra.mxu0 0
  %797 = vmatprep.subr.bf16.mxu0 0
  %798 = vmatpush1.bf16.msra.mxu0 0
  %799 = vmatprep.subr.bf16.mxu0 0
  %800 = vmatpush1.bf16.msra.mxu0 0
  %801 = vmatprep.subr.bf16.mxu0 0
  %802 = vmatpush1.bf16.msra.mxu0 0
  %803 = vmatprep.subr.bf16.mxu0 0
  %804 = vmatpush1.bf16.msra.mxu0 0
  %805 = vmatprep.subr.bf16.mxu0 0
  %806 = vmatpush1.bf16.msra.mxu0 0
  %807 = vmatprep.subr.bf16.mxu0 0
  %808 = vmatpush1.bf16.msra.mxu0 %v298
  %809 = vmatprep.subr.bf16.mxu0 0
  %810 = vmatpush1.bf16.msra.mxu0 %v297
  %811 = vmatprep.subr.bf16.mxu0 0
  %812 = vmatpush2.bf16.msra.mxu0 0
  %813 = vmatprep.subr.bf16.mxu0 0
  %814 = vmatpush2.bf16.msra.mxu0 0
  %815 = vmatprep.subr.bf16.mxu0 0
  %816 = vmatpush2.bf16.msra.mxu0 0
  %817 = vmatprep.subr.bf16.mxu0 0
  %818 = vmatpush2.bf16.msra.mxu0 0
  %819 = vmatprep.subr.bf16.mxu0 0
  %820 = vmatpush2.bf16.msra.mxu0 0
  %821 = vmatprep.subr.bf16.mxu0 0
  %822 = vmatpush2.bf16.msra.mxu0 0
  %823 = vmatprep.subr.bf16.mxu0 0
  %824 = vmatpush2.bf16.msra.mxu0 0
  %825 = vmatprep.subr.bf16.mxu0 0
  %826 = vmatpush2.bf16.msra.mxu0 0
  %827 = vmatprep.mubr.bf16.mxu0 0
  %828 = vmatmul.mubr.bf16.gmra.mxu0 %v793
  %v829 = vpop.f32.mrf.mxu0
  %v830 = vadd.f32 0.0, %v829
  %v831 = vpop.f32.mrf.mxu0
  %v832 = vpop.f32.mrf.mxu0
  %v833 = vadd.f32 0.0, %v832
  %v834 = vpop.f32.mrf.mxu0
  %835 = vdwg.mxu0
  %v836 = vadd.f32 %v786, %v830
  %v837 = vadd.f32 %v787, %v833
  %v838 = vxor.u32 %v836, 2147483648
  %v839 = vxor.u32 %v837, 2147483648
  %v840 = vmul.f32 %v838, 1.442695
  %v841 = vpow.pop %v840
  %v842 = vmul.f32 %v839, 1.442695
  %v843 = vpow.pop %v842
  %v844 = vadd.f32 %v841, 1.0
  %v845 = vadd.f32 %v843, 1.0
  %v846 = vrcp.pop %v844
  %v847 = vmul.f32 1.0, %v846
  %v848 = vrcp.pop %v845
  %v849 = vmul.f32 1.0, %v848
  %v850 = vtanh.pop %v836
  %v851 = vtanh.pop %v837
  %v852 = vmul.f32 %v847, %v749
  %v853 = vmul.f32 %v849, %v750
  %856 = vrot.lane.b32.xlu0 %v850, 64
  %v857 = vpop.permute.xlu0 %856
  %858 = vrot.lane.b32.xlu0 %v851, 64
  %v859 = vpop.permute.xlu0 %858
  %v862 = vmul.f32 %v847, %v857
  %v863 = vmul.f32 %v849, %v859
  %866 = vrot.lane.b32.xlu0 %v862, 32
  %v867 = vpop.permute.xlu0 %866
  %868 = vrot.lane.b32.xlu0 %v863, 32
  %v869 = vpop.permute.xlu0 %868
  %v872 = vadd.f32 %v852, %v867
  %v873 = vadd.f32 %v853, %v869
  %v874 = vtanh.pop %v872
  %v875 = vtanh.pop %v873
  %878 = vrot.lane.b32.xlu0 %v874, 64
  %v879 = vpop.permute.xlu0 %878
  %880 = vrot.lane.b32.xlu0 %v875, 64
  %v881 = vpop.permute.xlu0 %880
  %v884 = vmul.f32 %v847, %v879
  %v885 = vmul.f32 %v849, %v881
  %s886 = sadd.s32 %s404, 4
  %p887 = scmp.lt.s32.totalorder %s886, 5
  %s888 = scalar_select %p887, 1, 0
  %v889 = vstv %s888
  %vm890 = vcmp.eq.s32.totalorder %v889, 1
  %v891 = vsel %vm890, %v884, %v747
  %v892 = vsel %vm890, %v885, %v748
  %v893 = vsel %vm890, %v872, %v749
  %v894 = vsel %vm890, %v873, %v750
  %s895 = scalar_lea.vmem [#allocation2], 80
  %v896 = vld [vmem:[%s895] sm:$0xff]
  %v897 = vld [vmem:[%s895 + $0x8] sm:$0xff]
  %v898 = vpack.c.bf16 %v892, %v891
  %900 = vrot.lane.b32.xlu0 %v898, 32
  %v901 = vpop.permute.xlu0 %900
  %v903 = vsel %vm301, %v901, 0
  %905 = vmatprep.subr.bf16.mxu0 0
  %906 = vmatpush1.bf16.msra.mxu0 0
  %907 = vmatprep.subr.bf16.mxu0 0
  %908 = vmatpush1.bf16.msra.mxu0 0
  %909 = vmatprep.subr.bf16.mxu0 0
  %910 = vmatpush1.bf16.msra.mxu0 0
  %911 = vmatprep.subr.bf16.mxu0 0
  %912 = vmatpush1.bf16.msra.mxu0 0
  %913 = vmatprep.subr.bf16.mxu0 0
  %914 = vmatpush1.bf16.msra.mxu0 0
  %915 = vmatprep.subr.bf16.mxu0 0
  %916 = vmatpush1.bf16.msra.mxu0 0
  %917 = vmatprep.subr.bf16.mxu0 0
  %918 = vmatpush1.bf16.msra.mxu0 %v298
  %919 = vmatprep.subr.bf16.mxu0 0
  %920 = vmatpush1.bf16.msra.mxu0 %v297
  %921 = vmatprep.subr.bf16.mxu0 0
  %922 = vmatpush2.bf16.msra.mxu0 0
  %923 = vmatprep.subr.bf16.mxu0 0
  %924 = vmatpush2.bf16.msra.mxu0 0
  %925 = vmatprep.subr.bf16.mxu0 0
  %926 = vmatpush2.bf16.msra.mxu0 0
  %927 = vmatprep.subr.bf16.mxu0 0
  %928 = vmatpush2.bf16.msra.mxu0 0
  %929 = vmatprep.subr.bf16.mxu0 0
  %930 = vmatpush2.bf16.msra.mxu0 0
  %931 = vmatprep.subr.bf16.mxu0 0
  %932 = vmatpush2.bf16.msra.mxu0 0
  %933 = vmatprep.subr.bf16.mxu0 0
  %934 = vmatpush2.bf16.msra.mxu0 0
  %935 = vmatprep.subr.bf16.mxu0 0
  %936 = vmatpush2.bf16.msra.mxu0 0
  %937 = vmatprep.mubr.bf16.mxu0 0
  %938 = vmatmul.mubr.bf16.gmra.mxu0 %v903
  %v939 = vpop.f32.mrf.mxu0
  %v940 = vadd.f32 0.0, %v939
  %v941 = vpop.f32.mrf.mxu0
  %v942 = vpop.f32.mrf.mxu0
  %v943 = vadd.f32 0.0, %v942
  %v944 = vpop.f32.mrf.mxu0
  %945 = vdwg.mxu0
  %v946 = vadd.f32 %v896, %v940
  %v947 = vadd.f32 %v897, %v943
  %v948 = vxor.u32 %v946, 2147483648
  %v949 = vxor.u32 %v947, 2147483648
  %v950 = vmul.f32 %v948, 1.442695
  %v951 = vpow.pop %v950
  %v952 = vmul.f32 %v949, 1.442695
  %v953 = vpow.pop %v952
  %v954 = vadd.f32 %v951, 1.0
  %v955 = vadd.f32 %v953, 1.0
  %v956 = vrcp.pop %v954
  %v957 = vmul.f32 1.0, %v956
  %v958 = vrcp.pop %v955
  %v959 = vmul.f32 1.0, %v958
  %v960 = vtanh.pop %v946
  %v961 = vtanh.pop %v947
  %v962 = vmul.f32 %v957, %v893
  %v963 = vmul.f32 %v959, %v894
  %966 = vrot.lane.b32.xlu0 %v960, 64
  %v967 = vpop.permute.xlu0 %966
  %968 = vrot.lane.b32.xlu0 %v961, 64
  %v969 = vpop.permute.xlu0 %968
  %v972 = vmul.f32 %v957, %v967
  %v973 = vmul.f32 %v959, %v969
  %976 = vrot.lane.b32.xlu0 %v972, 32
  %v977 = vpop.permute.xlu0 %976
  %978 = vrot.lane.b32.xlu0 %v973, 32
  %v979 = vpop.permute.xlu0 %978
  %v982 = vadd.f32 %v962, %v977
  %v983 = vadd.f32 %v963, %v979
  %v984 = vtanh.pop %v982
  %v985 = vtanh.pop %v983
  %988 = vrot.lane.b32.xlu0 %v984, 64
  %v989 = vpop.permute.xlu0 %988
  %990 = vrot.lane.b32.xlu0 %v985, 64
  %v991 = vpop.permute.xlu0 %990
  %v994 = vmul.f32 %v957, %v989
  %v995 = vmul.f32 %v959, %v991
  %s996 = sadd.s32 %s404, 5
  %p997 = scmp.lt.s32.totalorder %s996, 5
  %s998 = scalar_select %p997, 1, 0
  %v999 = vstv %s998
  %vm1000 = vcmp.eq.s32.totalorder %v999, 1
  %v1001 = vsel %vm1000, %v994, %v891
  %v1002 = vsel %vm1000, %v995, %v892
  %v1003 = vsel %vm1000, %v982, %v893
  %v1004 = vsel %vm1000, %v983, %v894
  %s1005 = scalar_lea.vmem [#allocation2], 96
  %v1006 = vld [vmem:[%s1005] sm:$0xff]
  %v1007 = vld [vmem:[%s1005 + $0x8] sm:$0xff]
  %v1008 = vpack.c.bf16 %v1002, %v1001
  %1010 = vrot.lane.b32.xlu0 %v1008, 32
  %v1011 = vpop.permute.xlu0 %1010
  %v1013 = vsel %vm301, %v1011, 0
  %1015 = vmatprep.subr.bf16.mxu0 0
  %1016 = vmatpush1.bf16.msra.mxu0 0
  %1017 = vmatprep.subr.bf16.mxu0 0
  %1018 = vmatpush1.bf16.msra.mxu0 0
  %1019 = vmatprep.subr.bf16.mxu0 0
  %1020 = vmatpush1.bf16.msra.mxu0 0
  %1021 = vmatprep.subr.bf16.mxu0 0
  %1022 = vmatpush1.bf16.msra.mxu0 0
  %1023 = vmatprep.subr.bf16.mxu0 0
  %1024 = vmatpush1.bf16.msra.mxu0 0
  %1025 = vmatprep.subr.bf16.mxu0 0
  %1026 = vmatpush1.bf16.msra.mxu0 0
  %1027 = vmatprep.subr.bf16.mxu0 0
  %1028 = vmatpush1.bf16.msra.mxu0 %v298
  %1029 = vmatprep.subr.bf16.mxu0 0
  %1030 = vmatpush1.bf16.msra.mxu0 %v297
  %1031 = vmatprep.subr.bf16.mxu0 0
  %1032 = vmatpush2.bf16.msra.mxu0 0
  %1033 = vmatprep.subr.bf16.mxu0 0
  %1034 = vmatpush2.bf16.msra.mxu0 0
  %1035 = vmatprep.subr.bf16.mxu0 0
  %1036 = vmatpush2.bf16.msra.mxu0 0
  %1037 = vmatprep.subr.bf16.mxu0 0
  %1038 = vmatpush2.bf16.msra.mxu0 0
  %1039 = vmatprep.subr.bf16.mxu0 0
  %1040 = vmatpush2.bf16.msra.mxu0 0
  %1041 = vmatprep.subr.bf16.mxu0 0
  %1042 = vmatpush2.bf16.msra.mxu0 0
  %1043 = vmatprep.subr.bf16.mxu0 0
  %1044 = vmatpush2.bf16.msra.mxu0 0
  %1045 = vmatprep.subr.bf16.mxu0 0
  %1046 = vmatpush2.bf16.msra.mxu0 0
  %1047 = vmatprep.mubr.bf16.mxu0 0
  %1048 = vmatmul.mubr.bf16.gmra.mxu0 %v1013
  %v1049 = vpop.f32.mrf.mxu0
  %v1050 = vadd.f32 0.0, %v1049
  %v1051 = vpop.f32.mrf.mxu0
  %v1052 = vpop.f32.mrf.mxu0
  %v1053 = vadd.f32 0.0, %v1052
  %v1054 = vpop.f32.mrf.mxu0
  %1055 = vdwg.mxu0
  %v1056 = vadd.f32 %v1006, %v1050
  %v1057 = vadd.f32 %v1007, %v1053
  %v1058 = vxor.u32 %v1056, 2147483648
  %v1059 = vxor.u32 %v1057, 2147483648
  %v1060 = vmul.f32 %v1058, 1.442695
  %v1061 = vpow.pop %v1060
  %v1062 = vmul.f32 %v1059, 1.442695
  %v1063 = vpow.pop %v1062
  %v1064 = vadd.f32 %v1061, 1.0
  %v1065 = vadd.f32 %v1063, 1.0
  %v1066 = vrcp.pop %v1064
  %v1067 = vmul.f32 1.0, %v1066
  %v1068 = vrcp.pop %v1065
  %v1069 = vmul.f32 1.0, %v1068
  %v1070 = vtanh.pop %v1056
  %v1071 = vtanh.pop %v1057
  %v1072 = vmul.f32 %v1067, %v1003
  %v1073 = vmul.f32 %v1069, %v1004
  %1076 = vrot.lane.b32.xlu0 %v1070, 64
  %v1077 = vpop.permute.xlu0 %1076
  %1078 = vrot.lane.b32.xlu0 %v1071, 64
  %v1079 = vpop.permute.xlu0 %1078
  %v1082 = vmul.f32 %v1067, %v1077
  %v1083 = vmul.f32 %v1069, %v1079
  %1086 = vrot.lane.b32.xlu0 %v1082, 32
  %v1087 = vpop.permute.xlu0 %1086
  %1088 = vrot.lane.b32.xlu0 %v1083, 32
  %v1089 = vpop.permute.xlu0 %1088
  %v1092 = vadd.f32 %v1072, %v1087
  %v1093 = vadd.f32 %v1073, %v1089
  %v1094 = vtanh.pop %v1092
  %v1095 = vtanh.pop %v1093
  %1098 = vrot.lane.b32.xlu0 %v1094, 64
  %v1099 = vpop.permute.xlu0 %1098
  %1100 = vrot.lane.b32.xlu0 %v1095, 64
  %v1101 = vpop.permute.xlu0 %1100
  %v1104 = vmul.f32 %v1067, %v1099
  %v1105 = vmul.f32 %v1069, %v1101
  %s1106 = sadd.s32 %s404, 6
  %p1107 = scmp.lt.s32.totalorder %s1106, 5
  %s1108 = scalar_select %p1107, 1, 0
  %v1109 = vstv %s1108
  %vm1110 = vcmp.eq.s32.totalorder %v1109, 1
  %v1111 = vsel %vm1110, %v1104, %v1001
  %v1112 = vsel %vm1110, %v1105, %v1002
  %v1113 = vsel %vm1110, %v1092, %v1003
  %v1114 = vsel %vm1110, %v1093, %v1004
  %s1115 = scalar_lea.vmem [#allocation2], 112
  %v1116 = vld [vmem:[%s1115] sm:$0xff]
  %v1117 = vld [vmem:[%s1115 + $0x8] sm:$0xff]
  %v1118 = vpack.c.bf16 %v1112, %v1111
  %1120 = vrot.lane.b32.xlu0 %v1118, 32
  %v1121 = vpop.permute.xlu0 %1120
  %v1123 = vsel %vm301, %v1121, 0
  %1125 = vmatprep.subr.bf16.mxu0 0
  %1126 = vmatpush1.bf16.msra.mxu0 0
  %1127 = vmatprep.subr.bf16.mxu0 0
  %1128 = vmatpush1.bf16.msra.mxu0 0
  %1129 = vmatprep.subr.bf16.mxu0 0
  %1130 = vmatpush1.bf16.msra.mxu0 0
  %1131 = vmatprep.subr.bf16.mxu0 0
  %1132 = vmatpush1.bf16.msra.mxu0 0
  %1133 = vmatprep.subr.bf16.mxu0 0
  %1134 = vmatpush1.bf16.msra.mxu0 0
  %1135 = vmatprep.subr.bf16.mxu0 0
  %1136 = vmatpush1.bf16.msra.mxu0 0
  %1137 = vmatprep.subr.bf16.mxu0 0
  %1138 = vmatpush1.bf16.msra.mxu0 %v298
  %1139 = vmatprep.subr.bf16.mxu0 0
  %1140 = vmatpush1.bf16.msra.mxu0 %v297
  %1141 = vmatprep.subr.bf16.mxu0 0
  %1142 = vmatpush2.bf16.msra.mxu0 0
  %1143 = vmatprep.subr.bf16.mxu0 0
  %1144 = vmatpush2.bf16.msra.mxu0 0
  %1145 = vmatprep.subr.bf16.mxu0 0
  %1146 = vmatpush2.bf16.msra.mxu0 0
  %1147 = vmatprep.subr.bf16.mxu0 0
  %1148 = vmatpush2.bf16.msra.mxu0 0
  %1149 = vmatprep.subr.bf16.mxu0 0
  %1150 = vmatpush2.bf16.msra.mxu0 0
  %1151 = vmatprep.subr.bf16.mxu0 0
  %1152 = vmatpush2.bf16.msra.mxu0 0
  %1153 = vmatprep.subr.bf16.mxu0 0
  %1154 = vmatpush2.bf16.msra.mxu0 0
  %1155 = vmatprep.subr.bf16.mxu0 0
  %1156 = vmatpush2.bf16.msra.mxu0 0
  %1157 = vmatprep.mubr.bf16.mxu0 0
  %1158 = vmatmul.mubr.bf16.gmra.mxu0 %v1123
  %v1159 = vpop.f32.mrf.mxu0
  %v1160 = vadd.f32 0.0, %v1159
  %v1161 = vpop.f32.mrf.mxu0
  %v1162 = vpop.f32.mrf.mxu0
  %v1163 = vadd.f32 0.0, %v1162
  %v1164 = vpop.f32.mrf.mxu0
  %1165 = vdwg.mxu0
  %v1166 = vadd.f32 %v1116, %v1160
  %v1167 = vadd.f32 %v1117, %v1163
  %v1168 = vxor.u32 %v1166, 2147483648
  %v1169 = vxor.u32 %v1167, 2147483648
  %v1170 = vmul.f32 %v1168, 1.442695
  %v1171 = vpow.pop %v1170
  %v1172 = vmul.f32 %v1169, 1.442695
  %v1173 = vpow.pop %v1172
  %v1174 = vadd.f32 %v1171, 1.0
  %v1175 = vadd.f32 %v1173, 1.0
  %v1176 = vrcp.pop %v1174
  %v1177 = vmul.f32 1.0, %v1176
  %v1178 = vrcp.pop %v1175
  %v1179 = vmul.f32 1.0, %v1178
  %v1180 = vtanh.pop %v1166
  %v1181 = vtanh.pop %v1167
  %v1182 = vmul.f32 %v1177, %v1113
  %v1183 = vmul.f32 %v1179, %v1114
  %1186 = vrot.lane.b32.xlu0 %v1180, 64
  %v1187 = vpop.permute.xlu0 %1186
  %1188 = vrot.lane.b32.xlu0 %v1181, 64
  %v1189 = vpop.permute.xlu0 %1188
  %v1192 = vmul.f32 %v1177, %v1187
  %v1193 = vmul.f32 %v1179, %v1189
  %1196 = vrot.lane.b32.xlu0 %v1192, 32
  %v1197 = vpop.permute.xlu0 %1196
  %1198 = vrot.lane.b32.xlu0 %v1193, 32
  %v1199 = vpop.permute.xlu0 %1198
  %v1202 = vadd.f32 %v1182, %v1197
  %v1203 = vadd.f32 %v1183, %v1199
  %v1204 = vtanh.pop %v1202
  %v1205 = vtanh.pop %v1203
  %1208 = vrot.lane.b32.xlu0 %v1204, 64
  %v1209 = vpop.permute.xlu0 %1208
  %1210 = vrot.lane.b32.xlu0 %v1205, 64
  %v1211 = vpop.permute.xlu0 %1210
  %v1214 = vmul.f32 %v1177, %v1209
  %v1215 = vmul.f32 %v1179, %v1211
  %s1216 = sadd.s32 %s404, 7
  %p1217 = scmp.lt.s32.totalorder %s1216, 5
  %s1218 = scalar_select %p1217, 1, 0
  %v1219 = vstv %s1218
  %vm1220 = vcmp.eq.s32.totalorder %v1219, 1
  %v1221 = vsel %vm1220, %v1214, %v1111
  %v1222 = vsel %vm1220, %v1215, %v1112
  %v1223 = vsel %vm1220, %v1202, %v1113
  %v1224 = vsel %vm1220, %v1203, %v1114
  %1227 = vrot.lane.b32.xlu0 %v884, 32
  %v1228 = vpop.permute.xlu0 %1227
  %1229 = vrot.lane.b32.xlu0 %v885, 32
  %v1230 = vpop.permute.xlu0 %1229
  %1235 = vrot.lane.b32.xlu0 %v994, 64
  %v1236 = vpop.permute.xlu0 %1235
  %1237 = vrot.lane.b32.xlu0 %v995, 64
  %v1238 = vpop.permute.xlu0 %1237
  %1243 = vrot.lane.b32.xlu0 %v1104, 96
  %v1244 = vpop.permute.xlu0 %1243
  %1245 = vrot.lane.b32.xlu0 %v1105, 96
  %v1246 = vpop.permute.xlu0 %1245
  %v1249 = vsel %vm301, %v1228, %v1236
  %v1250 = vsel %vm301, %v1230, %v1238
  %v1251 = vsel %vm777, %v1249, %v1244
  %v1252 = vsel %vm777, %v1250, %v1246
  %v1253 = vsel %vm780, %v1251, %v1214
  %v1254 = vsel %vm780, %v1252, %v1215
  %s1255 = scalar_lea.vmem %s6, 16
  %1256 = vst [vmem:[%s1255] sm:$0xff] %v1253
  %1257 = vst [vmem:[%s1255 + $0x8] sm:$0xff] %v1254
  %1260 = vrot.lane.b32.xlu0 %v1221, 32
  %v1261 = vpop.permute.xlu0 %1260
  %1262 = vrot.lane.b32.xlu0 %v1222, 32
  %v1263 = vpop.permute.xlu0 %1262
  %1266 = vst.msk [vmem:[#allocation3] sm:$0xff] %vm301, %v1261
  %1267 = vst.msk [vmem:[#allocation3 + $0x8] sm:$0xff] %vm301, %v1263
  %1270 = vrot.lane.b32.xlu0 %v1223, 96
  %v1271 = vpop.permute.xlu0 %1270
  %1272 = vrot.lane.b32.xlu0 %v1224, 96
  %v1273 = vpop.permute.xlu0 %1272
  %1276 = vst.msk [vmem:[#allocation4] sm:$0xff] %vm301, %v1271
  %1277 = vst.msk [vmem:[#allocation4 + $0x8] sm:$0xff] %vm301, %v1273
  // Predicated region
  $region30: #{lstm_forward_pallas.1} parent=0 // pred_check
    %p1278 = pneg %p27
  $region31: #{lstm_forward_pallas.1} parent=0 // pred_check_branch
    %1280 = sbr.rel (%p1278) target = $region33
  $region32: #{lstm_forward_pallas.1} parent=0 // pred_region
    %1281 = vst.msk [vmem:[%s7] sm:$0xff] %vm301, %v1261
    %1282 = vst.msk [vmem:[%s7 + $0x8] sm:$0xff] %vm301, %v1263
    %1283 = vst.msk [vmem:[%s8] sm:$0xff] %vm301, %v1271
    %1284 = vst.msk [vmem:[%s8 + $0x8] sm:$0xff] %vm301, %v1273
  $region33: #{lstm_forward_pallas.1} parent=0 // pred_fallthru
    _
  // Predicated region
  $region34: #{lstm_forward_pallas.1} parent=0 // pred_check
    _
  $region35: #{lstm_forward_pallas.1} parent=0 // pred_check_branch
    %1286 = sbr.rel (0) target = $region37
  $region36: #{lstm_forward_pallas.1} parent=0 // pred_region
    _
  $region37: #{lstm_forward_pallas.1} parent=0 // pred_fallthru
    _
  // Predicated region
  $region38: #{lstm_forward_pallas.1} parent=0 // pred_check
    _
  $region39: #{lstm_forward_pallas.1} parent=0 // pred_check_branch
    %1288 = sbr.rel (0) target = $region41
  $region40: #{lstm_forward_pallas.1} parent=0 // pred_region
    _
  $region41: #{lstm_forward_pallas.1} parent=0 // pred_fallthru
    _
  // Predicated region
  $region42: #{lstm_forward_pallas.1} parent=0 // pred_check
    _
  $region43: #{lstm_forward_pallas.1} parent=0 // pred_check_branch
    %1290 = sbr.rel (0) target = $region45
  $region44: #{lstm_forward_pallas.1} parent=0 // pred_region
    _
  $region45: #{lstm_forward_pallas.1} parent=0 // pred_fallthru
    _
  // Predicated region
  $region46: #{lstm_forward_pallas.1} parent=0 // pred_check
    _
  $region47: #{lstm_forward_pallas.1} parent=0 // pred_check_branch
    %1292 = sbr.rel (0) target = $region49
  $region48: #{lstm_forward_pallas.1} parent=0 // pred_region
    _
  $region49: #{lstm_forward_pallas.1} parent=0 // pred_fallthru
    _
  // Predicated region
  $region50: #{lstm_forward_pallas.1} parent=0 // pred_check
    _
  $region51: #{lstm_forward_pallas.1} parent=0 // pred_check_branch
    %1294 = sbr.rel (0) target = $region53
  $region52: #{lstm_forward_pallas.1} parent=0 // pred_region
    _
  $region53: #{lstm_forward_pallas.1} parent=0 // pred_fallthru
    _
  // Predicated region
  $region54: #{lstm_forward_pallas.1} parent=0 // pred_check
    _
  $region55: #{lstm_forward_pallas.1} parent=0 // pred_check_branch
    %1296 = sbr.rel (0) target = $region57
  $region56: #{lstm_forward_pallas.1} parent=0 // pred_region
    _
  $region57: #{lstm_forward_pallas.1} parent=0 // pred_fallthru
    _

</llo_original>
